<compile_context>
chip_gen: v6e
topology: v6e:2x2x1
jax: 0.10.0
libtpu: 0.0.40
codegen_flags: <defaults>
</compile_context>

<pallas_src>
import jax
import jax.numpy as jnp
from jax.experimental import pallas as pl
from jax.experimental.pallas import tpu as pltpu

_EPS = 1e-5  # BatchNorm2d default eps


# -----------------------------------------------------------------------------
# Small helpers
# -----------------------------------------------------------------------------
def _full_spec(shape):
    # Whole array as a single VMEM block (everything here is KB-scale).
    return pl.BlockSpec(shape, lambda *_: tuple(0 for _ in shape))


def _selector(n_out, n_in):
    # sel[k, o, i] = 1.0  iff  i == 2*o + k   (k in {0, 1, 2}) -- stride-2 picker.
    return (jnp.arange(n_in)[None, None, :] ==
            (2 * jnp.arange(n_out)[None, :, None]
             + jnp.arange(3)[:, None, None])).astype(jnp.float32)


def _conv_schedule(h0, w0, conv_channels):
    schedule = []
    hi, wi, ci = h0, w0, 1
    for co in conv_channels:
        ho = (hi - 3) // 2 + 1
        wo = (wi - 3) // 2 + 1
        schedule.append(dict(Hi=hi, Wi=wi, Ci=ci, Ho=ho, Wo=wo, Co=co))
        hi, wi, ci = ho, wo, co
    return schedule


def _round_up(n, m):
    return -(-n // m) * m


def _pack(pieces):
    """Pack named 2-D f32 arrays into one [rows, lanes] slab.

    Row offsets are multiples of 8 (sublane tile) and the slab lane width is a
    multiple of 128, so every in-kernel static slice starts tile-aligned.
    Returns (slab, layout) with layout[name] = (row_off, rows, cols).
    """
    width = _round_up(max(int(a.shape[1]) for _, a in pieces), 128)
    layout, row = {}, 0
    for name, a in pieces:
        r, c = int(a.shape[0]), int(a.shape[1])
        layout[name] = (row, r, c)
        row += _round_up(r, 8)
    slab = jnp.zeros((row, width), jnp.float32)
    for name, a in pieces:
        ro, r, c = layout[name]
        slab = slab.at[ro:ro + r, :c].set(a.astype(jnp.float32))
    return slab, layout


# -----------------------------------------------------------------------------
# Fused kernel (built per static layer schedule + constant-slab layout)
# -----------------------------------------------------------------------------
def _make_encoder_kernel(batch, schedule, layout):
    def kernel(x_ref, c_ref, o_ref):
        def cload(name):
            ro, r, c = layout[name]
            return c_ref[pl.ds(ro, r), pl.ds(0, c)]

        f = x_ref[...]                                   # [B*H0, W0]  (Ci = 1)
        for l, sch in enumerate(schedule):
            ho, wo, co = sch["Ho"], sch["Wo"], sch["Co"]
            wo_co = wo * co
            cpad = _round_up(wo_co, 128)                 # kh-block stride inside R/G

            # ---- Conv2d(k=3, s=2, VALID); bias folded into training-mode BN ----
            #   G = f @ [R_0 | R_1 | R_2]   (kh blocks padded to 128-lane boundary)
            #   y = sum_kh S_kh @ G[:, kh-block]     (S_kh block-diagonal over batch)
            g = jnp.dot(f, cload(f"R{l}"),
                        preferred_element_type=jnp.float32)     # [B*Hi, 3*cpad]
            y = None
            for kh in range(3):
                part = jnp.dot(cload(f"S{l}k{kh}"),
                               g[:, kh * cpad:kh * cpad + wo_co],
                               preferred_element_type=jnp.float32)
                y = part if y is None else y + part             # [B*Ho, Wo*Co]

            # ---- BatchNorm2d (training mode, biased var, two-pass) + ReLU ------
            # P gathers per-lane sums into per-channel batch stats (pre-divided by
            # N = B*Ho*Wo) and broadcasts them back over the Wo lane groups.
            p = cload(f"P{l}")                                  # [Wo*Co, Wo*Co]
            mean = jnp.dot(jnp.sum(y, axis=0, keepdims=True), p,
                           preferred_element_type=jnp.float32)  # [1, Wo*Co]
            d = y - mean
            var = jnp.dot(jnp.sum(d * d, axis=0, keepdims=True), p,
                          preferred_element_type=jnp.float32)   # [1, Wo*Co]
            a = cload(f"gamma{l}") * jax.lax.rsqrt(var + _EPS)
            f = jnp.maximum(a * d + cload(f"beta{l}"), 0.0)     # next layer's input

        # ---- AdaptiveMaxPool2d(1) + Flatten + Linear ---------------------------
        ho, wo, co = (schedule[-1][k] for k in ("Ho", "Wo", "Co"))
        m = f[:, 0:co]                                          # max over width
        for wv in range(1, wo):
            m = jnp.maximum(m, f[:, wv * co:(wv + 1) * co])     # [B*Ho, Co]
        row_ids = jax.lax.broadcasted_iota(jnp.int32, (batch, co), 0)
        pooled = jnp.zeros((batch, co), jnp.float32)
        for b in range(batch):                                  # max over height
            mb = jnp.max(m[b * ho:(b + 1) * ho, :], axis=0, keepdims=True)
            pooled = jnp.where(row_ids == b, mb, pooled)        # [B, Co_last]
        o_ref[...] = (jnp.dot(pooled, cload("LW"),
                              preferred_element_type=jnp.float32)
                      + cload("LB"))

    return kernel


# -----------------------------------------------------------------------------
# Builder: pack constants once, return a jitted forward(consts, x_nchw)
# -----------------------------------------------------------------------------
def build_encoder(params, batch, h0, w0):
    convs = params["convs"]
    schedule = _conv_schedule(h0, w0, [c["w"].shape[0] for c in convs])

    pieces = []
    eye_b = jnp.eye(batch, dtype=jnp.float32)
    for l, (layer, sch) in enumerate(zip(convs, schedule)):
        hi, wi, ci = sch["Hi"], sch["Wi"], sch["Ci"]
        ho, wo, co = sch["Ho"], sch["Wo"], sch["Co"]
        wo_co = wo * co
        cpad = _round_up(wo_co, 128)

        # Block-diagonal (over batch) stride-2 row selectors, one per kh.
        s_small = _selector(ho, hi)                       # [3, Ho, Hi]
        for kh in range(3):
            pieces.append((f"S{l}k{kh}", jnp.kron(eye_b, s_small[kh])))  # [B*Ho, B*Hi]

        # Width-expanded conv weights, kh blocks side by side (128-lane aligned):
        #   R[wi*Ci+ci, kh*cpad + wo*Co+co] = w[co, ci, kh, wi - 2*wo]
        w = layer["w"]                                    # [Co, Ci, 3, 3]
        oh = _selector(wo, wi)                            # [3(kw), Wo, Wi]
        wm = jnp.transpose(w, (2, 3, 1, 0))               # [kh, kw, Ci, Co]
        r4 = jnp.einsum("koi,hkcd->hicod", oh, wm)        # [kh, Wi, Ci, Wo, Co]
        r_wide = jnp.transpose(r4, (1, 2, 0, 3, 4)).reshape(wi * ci, 3 * wo_co)
        r_pad = jnp.zeros((wi * ci, 3 * cpad), jnp.float32)
        for kh in range(3):
            r_pad = r_pad.at[:, kh * cpad:kh * cpad + wo_co].set(
                r_wide[:, kh * wo_co:(kh + 1) * wo_co])
        pieces.append((f"R{l}", r_pad))

        # Per-channel gather/broadcast matrix for BN stats (pre-divided by N).
        n_samples = float(batch * ho * wo)
        pieces.append((f"P{l}",
                       jnp.tile(jnp.eye(co, dtype=jnp.float32), (wo, wo)) / n_samples))
        pieces.append((f"gamma{l}", jnp.tile(layer["gamma"], wo)[None, :]))
        pieces.append((f"beta{l}", jnp.tile(layer["beta"], wo)[None, :]))
        # NOTE: layer["b"] (conv bias) intentionally omitted -- it is absorbed
        # exactly by the training-mode BatchNorm batch mean.

    pieces.append(("LW", jnp.transpose(params["lin_w"], (1, 0))))  # [C_last, hidden]
    pieces.append(("LB", params["lin_b"][None, :]))                # [1, hidden]

    consts, layout = _pack(pieces)
    hidden = int(params["lin_w"].shape[0])
    kernel = _make_encoder_kernel(batch, schedule, layout)

    def forward(consts_arr, x_nchw):
        # Encoder takes in_channel = 1; lane-dense input layout [B*H, W].
        x = x_nchw[:, 0, :, :].astype(jnp.float32).reshape(batch * h0, w0)
        return pl.pallas_call(
            kernel,
            out_shape=jax.ShapeDtypeStruct((batch, hidden), jnp.float32),
            grid=(1,),
            in_specs=[_full_spec(x.shape), _full_spec(consts_arr.shape)],
            out_specs=_full_spec((batch, hidden)),
            compiler_params=pltpu.CompilerParams(
                dimension_semantics=("arbitrary",)),
        )(x, consts_arr)

    return jax.jit(forward), consts


# -----------------------------------------------------------------------------
# Parameters (mirroring the PyTorch module) and a pure-JAX reference
# -----------------------------------------------------------------------------
def init_encoder_params(key, hidden_dim, conv_dims):
    params = {"convs": []}
    in_ch = 1
    for c in conv_dims:
        key, k1, k2 = jax.random.split(key, 3)
        w = jax.random.normal(k1, (c, in_ch, 3, 3), jnp.float32) * 0.1
        b = jax.random.normal(k2, (c,), jnp.float32) * 0.01   # absorbed by BN
        gamma = jnp.ones((c,), jnp.float32)                   # PyTorch BN init
        beta = jnp.zeros((c,), jnp.float32)
        params["convs"].append({"w": w, "b": b, "gamma": gamma, "beta": beta})
        in_ch = c
    key, k1, k2 = jax.random.split(key, 3)
    params["lin_w"] = jax.random.normal(k1, (hidden_dim, conv_dims[-1]),
                                        jnp.float32) * 0.1
    params["lin_b"] = jax.random.normal(k2, (hidden_dim,), jnp.float32) * 0.01
    return params


def encoder_reference(params, x_nchw):
    """Pure-JAX (XLA) reference of the PyTorch forward (training-mode BN)."""
    x = x_nchw
    for layer in params["convs"]:
        y = jax.lax.conv_general_dilated(
            x, layer["w"], window_strides=(2, 2), padding="VALID",
            dimension_numbers=("NCHW", "OIHW", "NCHW"))
        y = y + layer["b"][None, :, None, None]
        mean = jnp.mean(y, axis=(0, 2, 3), keepdims=True)
        var = jnp.var(y, axis=(0, 2, 3), keepdims=True)      # biased, like BN
        y = (y - mean) * jax.lax.rsqrt(var + _EPS)
        y = (layer["gamma"][None, :, None, None] * y
             + layer["beta"][None, :, None, None])
        x = jnp.maximum(y, 0.0)
    pooled = jnp.max(x, axis=(2, 3))                         # AdaptiveMaxPool2d(1)
    return pooled @ params["lin_w"].T + params["lin_b"][None, :]


# -----------------------------------------------------------------------------
if __name__ == "__main__":
    key = jax.random.PRNGKey(0)
    hidden_dim = 32
    conv_dims = [4, 8, 16]

    kp, kx = jax.random.split(key)
    params = init_encoder_params(kp, hidden_dim, conv_dims)

    # Encoder expects 1 input channel (in_channel=1 in __init__).
    x = jax.random.normal(kx, (2, 1, 29, 29), jnp.float32)   # NCHW

    forward, consts = build_encoder(params, batch=2, h0=29, w0=29)  # built/packed once
    out = forward(consts, x)
    out = jax.block_until_ready(out)
    assert out.shape == (2, hidden_dim), out.shape
    assert out.dtype == jnp.float32

    ref = encoder_reference(params, x)
    err = float(jnp.max(jnp.abs(out - ref)))
    assert err < 2e-3, f"kernel/reference mismatch: max abs err = {err}"

    print("KERNEL_OK")
</pallas_src>

<mosaic_0001>
module attributes {stable_mosaic.version = 11 : i64} {
  func.func @kernel(%arg0: i32, %arg1: memref<58x29xf32, #tpu.memory_space<vmem>>, %arg2: memref<512x384xf32, #tpu.memory_space<vmem>>, %arg3: memref<2x32xf32, #tpu.memory_space<vmem>>) attributes {dimension_semantics = [#tpu.dimension_semantics<arbitrary>], iteration_bounds = array<i64: 1>, scalar_prefetch = 0 : i64, scratch_operands = 0 : i64, tpu.core_type = #tpu.core_type<tc>, window_params = [{pipeline_mode = #tpu.pipeline_mode<synchronous>, transform_indices = @transform_0, window_bounds = array<i64: 58, 29>}, {pipeline_mode = #tpu.pipeline_mode<synchronous>, transform_indices = @transform_1, window_bounds = array<i64: 512, 384>}, {pipeline_mode = #tpu.pipeline_mode<synchronous>, transform_indices = @transform_2, window_bounds = array<i64: 2, 32>}]} {
    %c0 = arith.constant 0 : index
    %c0_0 = arith.constant 0 : index
    %0 = vector.load %arg1[%c0, %c0_0] : memref<58x29xf32, #tpu.memory_space<vmem>>, vector<58x29xf32>
    %c96 = arith.constant 96 : index
    %c0_1 = arith.constant 0 : index
    %1 = vector.load %arg2[%c96, %c0_1] : memref<512x384xf32, #tpu.memory_space<vmem>>, vector<29x384xf32>
    %cst = arith.constant dense<0.000000e+00> : vector<58x384xf32>
    %2 = tpu.matmul %0, %1, %cst {dimension_numbers = #tpu.dot_dimension_numbers<[1], [0], [0], [1], [0, 0, 1, 1], [], []>} : vector<58x29xf32>, vector<29x384xf32>, vector<58x384xf32> -> vector<58x384xf32>
    %c0_2 = arith.constant 0 : index
    %c0_3 = arith.constant 0 : index
    %3 = vector.load %arg2[%c0_2, %c0_3] : memref<512x384xf32, #tpu.memory_space<vmem>>, vector<28x58xf32>
    %4 = vector.extract_strided_slice %2 {offsets = [0, 0], sizes = [58, 56], strides = [1, 1]} : vector<58x384xf32> to vector<58x56xf32>
    %cst_4 = arith.constant dense<0.000000e+00> : vector<28x56xf32>
    %5 = tpu.matmul %3, %4, %cst_4 {dimension_numbers = #tpu.dot_dimension_numbers<[1], [0], [0], [1], [0, 0, 1, 1], [], []>} : vector<28x58xf32>, vector<58x56xf32>, vector<28x56xf32> -> vector<28x56xf32>
    %c32 = arith.constant 32 : index
    %c0_5 = arith.constant 0 : index
    %6 = vector.load %arg2[%c32, %c0_5] : memref<512x384xf32, #tpu.memory_space<vmem>>, vector<28x58xf32>
    %7 = vector.extract_strided_slice %2 {offsets = [0, 128], sizes = [58, 56], strides = [1, 1]} : vector<58x384xf32> to vector<58x56xf32>
    %cst_6 = arith.constant dense<0.000000e+00> : vector<28x56xf32>
    %8 = tpu.matmul %6, %7, %cst_6 {dimension_numbers = #tpu.dot_dimension_numbers<[1], [0], [0], [1], [0, 0, 1, 1], [], []>} : vector<28x58xf32>, vector<58x56xf32>, vector<28x56xf32> -> vector<28x56xf32>
    %9 = arith.addf %5, %8 : vector<28x56xf32>
    %c64 = arith.constant 64 : index
    %c0_7 = arith.constant 0 : index
    %10 = vector.load %arg2[%c64, %c0_7] : memref<512x384xf32, #tpu.memory_space<vmem>>, vector<28x58xf32>
    %11 = vector.extract_strided_slice %2 {offsets = [0, 256], sizes = [58, 56], strides = [1, 1]} : vector<58x384xf32> to vector<58x56xf32>
    %cst_8 = arith.constant dense<0.000000e+00> : vector<28x56xf32>
    %12 = tpu.matmul %10, %11, %cst_8 {dimension_numbers = #tpu.dot_dimension_numbers<[1], [0], [0], [1], [0, 0, 1, 1], [], []>} : vector<28x58xf32>, vector<58x56xf32>, vector<28x56xf32> -> vector<28x56xf32>
    %13 = arith.addf %9, %12 : vector<28x56xf32>
    %c128 = arith.constant 128 : index
    %c0_9 = arith.constant 0 : index
    %14 = vector.load %arg2[%c128, %c0_9] : memref<512x384xf32, #tpu.memory_space<vmem>>, vector<56x56xf32>
    %cst_10 = arith.constant dense<0.000000e+00> : vector<56xf32>
    %15 = vector.multi_reduction <add>, %13, %cst_10 [0] : vector<28x56xf32> to vector<56xf32>
    %16 = vector.shape_cast %15 : vector<56xf32> to vector<1x56xf32>
    %cst_11 = arith.constant dense<0.000000e+00> : vector<1x56xf32>
    %17 = tpu.matmul %16, %14, %cst_11 {dimension_numbers = #tpu.dot_dimension_numbers<[1], [0], [0], [1], [0, 0, 1, 1], [], []>} : vector<1x56xf32>, vector<56x56xf32>, vector<1x56xf32> -> vector<1x56xf32>
    %18 = vector.broadcast %17 : vector<1x56xf32> to vector<28x56xf32>
    %19 = arith.subf %13, %18 : vector<28x56xf32>
    %20 = arith.mulf %19, %19 : vector<28x56xf32>
    %cst_12 = arith.constant dense<0.000000e+00> : vector<56xf32>
    %21 = vector.multi_reduction <add>, %20, %cst_12 [0] : vector<28x56xf32> to vector<56xf32>
    %22 = vector.shape_cast %21 : vector<56xf32> to vector<1x56xf32>
    %cst_13 = arith.constant dense<0.000000e+00> : vector<1x56xf32>
    %23 = tpu.matmul %22, %14, %cst_13 {dimension_numbers = #tpu.dot_dimension_numbers<[1], [0], [0], [1], [0, 0, 1, 1], [], []>} : vector<1x56xf32>, vector<56x56xf32>, vector<1x56xf32> -> vector<1x56xf32>
    %c184 = arith.constant 184 : index
    %c0_14 = arith.constant 0 : index
    %24 = vector.load %arg2[%c184, %c0_14] : memref<512x384xf32, #tpu.memory_space<vmem>>, vector<1x56xf32>
    %cst_15 = arith.constant 9.99999974E-6 : f32
    %25 = vector.broadcast %cst_15 : f32 to vector<1x56xf32>
    %26 = arith.addf %23, %25 : vector<1x56xf32>
    %27 = math.rsqrt %26 : vector<1x56xf32>
    %28 = arith.mulf %24, %27 : vector<1x56xf32>
    %29 = vector.broadcast %28 : vector<1x56xf32> to vector<28x56xf32>
    %30 = arith.mulf %29, %19 : vector<28x56xf32>
    %c192 = arith.constant 192 : index
    %c0_16 = arith.constant 0 : index
    %31 = vector.load %arg2[%c192, %c0_16] : memref<512x384xf32, #tpu.memory_space<vmem>>, vector<1x56xf32>
    %32 = vector.broadcast %31 : vector<1x56xf32> to vector<28x56xf32>
    %33 = arith.addf %30, %32 : vector<28x56xf32>
    %cst_17 = arith.constant 0.000000e+00 : f32
    %34 = vector.broadcast %cst_17 : f32 to vector<28x56xf32>
    %35 = arith.maximumf %33, %34 : vector<28x56xf32>
    %c248 = arith.constant 248 : index
    %c0_18 = arith.constant 0 : index
    %36 = vector.load %arg2[%c248, %c0_18] : memref<512x384xf32, #tpu.memory_space<vmem>>, vector<56x384xf32>
    %cst_19 = arith.constant dense<0.000000e+00> : vector<28x384xf32>
    %37 = tpu.matmul %35, %36, %cst_19 {dimension_numbers = #tpu.dot_dimension_numbers<[1], [0], [0], [1], [0, 0, 1, 1], [], []>} : vector<28x56xf32>, vector<56x384xf32>, vector<28x384xf32> -> vector<28x384xf32>
    %c200 = arith.constant 200 : index
    %c0_20 = arith.constant 0 : index
    %38 = vector.load %arg2[%c200, %c0_20] : memref<512x384xf32, #tpu.memory_space<vmem>>, vector<12x28xf32>
    %39 = vector.extract_strided_slice %37 {offsets = [0, 0], sizes = [28, 48], strides = [1, 1]} : vector<28x384xf32> to vector<28x48xf32>
    %cst_21 = arith.constant dense<0.000000e+00> : vector<12x48xf32>
    %40 = tpu.matmul %38, %39, %cst_21 {dimension_numbers = #tpu.dot_dimension_numbers<[1], [0], [0], [1], [0, 0, 1, 1], [], []>} : vector<12x28xf32>, vector<28x48xf32>, vector<12x48xf32> -> vector<12x48xf32>
    %c216 = arith.constant 216 : index
    %c0_22 = arith.constant 0 : index
    %41 = vector.load %arg2[%c216, %c0_22] : memref<512x384xf32, #tpu.memory_space<vmem>>, vector<12x28xf32>
    %42 = vector.extract_strided_slice %37 {offsets = [0, 128], sizes = [28, 48], strides = [1, 1]} : vector<28x384xf32> to vector<28x48xf32>
    %cst_23 = arith.constant dense<0.000000e+00> : vector<12x48xf32>
    %43 = tpu.matmul %41, %42, %cst_23 {dimension_numbers = #tpu.dot_dimension_numbers<[1], [0], [0], [1], [0, 0, 1, 1], [], []>} : vector<12x28xf32>, vector<28x48xf32>, vector<12x48xf32> -> vector<12x48xf32>
    %44 = arith.addf %40, %43 : vector<12x48xf32>
    %c232 = arith.constant 232 : index
    %c0_24 = arith.constant 0 : index
    %45 = vector.load %arg2[%c232, %c0_24] : memref<512x384xf32, #tpu.memory_space<vmem>>, vector<12x28xf32>
    %46 = vector.extract_strided_slice %37 {offsets = [0, 256], sizes = [28, 48], strides = [1, 1]} : vector<28x384xf32> to vector<28x48xf32>
    %cst_25 = arith.constant dense<0.000000e+00> : vector<12x48xf32>
    %47 = tpu.matmul %45, %46, %cst_25 {dimension_numbers = #tpu.dot_dimension_numbers<[1], [0], [0], [1], [0, 0, 1, 1], [], []>} : vector<12x28xf32>, vector<28x48xf32>, vector<12x48xf32> -> vector<12x48xf32>
    %48 = arith.addf %44, %47 : vector<12x48xf32>
    %c304 = arith.constant 304 : index
    %c0_26 = arith.constant 0 : index
    %49 = vector.load %arg2[%c304, %c0_26] : memref<512x384xf32, #tpu.memory_space<vmem>>, vector<48x48xf32>
    %cst_27 = arith.constant dense<0.000000e+00> : vector<48xf32>
    %50 = vector.multi_reduction <add>, %48, %cst_27 [0] : vector<12x48xf32> to vector<48xf32>
    %51 = vector.shape_cast %50 : vector<48xf32> to vector<1x48xf32>
    %cst_28 = arith.constant dense<0.000000e+00> : vector<1x48xf32>
    %52 = tpu.matmul %51, %49, %cst_28 {dimension_numbers = #tpu.dot_dimension_numbers<[1], [0], [0], [1], [0, 0, 1, 1], [], []>} : vector<1x48xf32>, vector<48x48xf32>, vector<1x48xf32> -> vector<1x48xf32>
    %53 = vector.broadcast %52 : vector<1x48xf32> to vector<12x48xf32>
    %54 = arith.subf %48, %53 : vector<12x48xf32>
    %55 = arith.mulf %54, %54 : vector<12x48xf32>
    %cst_29 = arith.constant dense<0.000000e+00> : vector<48xf32>
    %56 = vector.multi_reduction <add>, %55, %cst_29 [0] : vector<12x48xf32> to vector<48xf32>
    %57 = vector.shape_cast %56 : vector<48xf32> to vector<1x48xf32>
    %cst_30 = arith.constant dense<0.000000e+00> : vector<1x48xf32>
    %58 = tpu.matmul %57, %49, %cst_30 {dimension_numbers = #tpu.dot_dimension_numbers<[1], [0], [0], [1], [0, 0, 1, 1], [], []>} : vector<1x48xf32>, vector<48x48xf32>, vector<1x48xf32> -> vector<1x48xf32>
    %c352 = arith.constant 352 : index
    %c0_31 = arith.constant 0 : index
    %59 = vector.load %arg2[%c352, %c0_31] : memref<512x384xf32, #tpu.memory_space<vmem>>, vector<1x48xf32>
    %cst_32 = arith.constant 9.99999974E-6 : f32
    %60 = vector.broadcast %cst_32 : f32 to vector<1x48xf32>
    %61 = arith.addf %58, %60 : vector<1x48xf32>
    %62 = math.rsqrt %61 : vector<1x48xf32>
    %63 = arith.mulf %59, %62 : vector<1x48xf32>
    %64 = vector.broadcast %63 : vector<1x48xf32> to vector<12x48xf32>
    %65 = arith.mulf %64, %54 : vector<12x48xf32>
    %c360 = arith.constant 360 : index
    %c0_33 = arith.constant 0 : index
    %66 = vector.load %arg2[%c360, %c0_33] : memref<512x384xf32, #tpu.memory_space<vmem>>, vector<1x48xf32>
    %67 = vector.broadcast %66 : vector<1x48xf32> to vector<12x48xf32>
    %68 = arith.addf %65, %67 : vector<12x48xf32>
    %cst_34 = arith.constant 0.000000e+00 : f32
    %69 = vector.broadcast %cst_34 : f32 to vector<12x48xf32>
    %70 = arith.maximumf %68, %69 : vector<12x48xf32>
    %c392 = arith.constant 392 : index
    %c0_35 = arith.constant 0 : index
    %71 = vector.load %arg2[%c392, %c0_35] : memref<512x384xf32, #tpu.memory_space<vmem>>, vector<48x384xf32>
    %cst_36 = arith.constant dense<0.000000e+00> : vector<12x384xf32>
    %72 = tpu.matmul %70, %71, %cst_36 {dimension_numbers = #tpu.dot_dimension_numbers<[1], [0], [0], [1], [0, 0, 1, 1], [], []>} : vector<12x48xf32>, vector<48x384xf32>, vector<12x384xf32> -> vector<12x384xf32>
    %c368 = arith.constant 368 : index
    %c0_37 = arith.constant 0 : index
    %73 = vector.load %arg2[%c368, %c0_37] : memref<512x384xf32, #tpu.memory_space<vmem>>, vector<4x12xf32>
    %74 = vector.extract_strided_slice %72 {offsets = [0, 0], sizes = [12, 32], strides = [1, 1]} : vector<12x384xf32> to vector<12x32xf32>
    %cst_38 = arith.constant dense<0.000000e+00> : vector<4x32xf32>
    %75 = tpu.matmul %73, %74, %cst_38 {dimension_numbers = #tpu.dot_dimension_numbers<[1], [0], [0], [1], [0, 0, 1, 1], [], []>} : vector<4x12xf32>, vector<12x32xf32>, vector<4x32xf32> -> vector<4x32xf32>
    %c376 = arith.constant 376 : index
    %c0_39 = arith.constant 0 : index
    %76 = vector.load %arg2[%c376, %c0_39] : memref<512x384xf32, #tpu.memory_space<vmem>>, vector<4x12xf32>
    %77 = vector.extract_strided_slice %72 {offsets = [0, 128], sizes = [12, 32], strides = [1, 1]} : vector<12x384xf32> to vector<12x32xf32>
    %cst_40 = arith.constant dense<0.000000e+00> : vector<4x32xf32>
    %78 = tpu.matmul %76, %77, %cst_40 {dimension_numbers = #tpu.dot_dimension_numbers<[1], [0], [0], [1], [0, 0, 1, 1], [], []>} : vector<4x12xf32>, vector<12x32xf32>, vector<4x32xf32> -> vector<4x32xf32>
    %79 = arith.addf %75, %78 : vector<4x32xf32>
    %c384 = arith.constant 384 : index
    %c0_41 = arith.constant 0 : index
    %80 = vector.load %arg2[%c384, %c0_41] : memref<512x384xf32, #tpu.memory_space<vmem>>, vector<4x12xf32>
    %81 = vector.extract_strided_slice %72 {offsets = [0, 256], sizes = [12, 32], strides = [1, 1]} : vector<12x384xf32> to vector<12x32xf32>
    %cst_42 = arith.constant dense<0.000000e+00> : vector<4x32xf32>
    %82 = tpu.matmul %80, %81, %cst_42 {dimension_numbers = #tpu.dot_dimension_numbers<[1], [0], [0], [1], [0, 0, 1, 1], [], []>} : vector<4x12xf32>, vector<12x32xf32>, vector<4x32xf32> -> vector<4x32xf32>
    %83 = arith.addf %79, %82 : vector<4x32xf32>
    %c440 = arith.constant 440 : index
    %c0_43 = arith.constant 0 : index
    %84 = vector.load %arg2[%c440, %c0_43] : memref<512x384xf32, #tpu.memory_space<vmem>>, vector<32x32xf32>
    %cst_44 = arith.constant dense<0.000000e+00> : vector<32xf32>
    %85 = vector.multi_reduction <add>, %83, %cst_44 [0] : vector<4x32xf32> to vector<32xf32>
    %86 = vector.shape_cast %85 : vector<32xf32> to vector<1x32xf32>
    %cst_45 = arith.constant dense<0.000000e+00> : vector<1x32xf32>
    %87 = tpu.matmul %86, %84, %cst_45 {dimension_numbers = #tpu.dot_dimension_numbers<[1], [0], [0], [1], [0, 0, 1, 1], [], []>} : vector<1x32xf32>, vector<32x32xf32>, vector<1x32xf32> -> vector<1x32xf32>
    %88 = vector.broadcast %87 : vector<1x32xf32> to vector<4x32xf32>
    %89 = arith.subf %83, %88 : vector<4x32xf32>
    %90 = arith.mulf %89, %89 : vector<4x32xf32>
    %cst_46 = arith.constant dense<0.000000e+00> : vector<32xf32>
    %91 = vector.multi_reduction <add>, %90, %cst_46 [0] : vector<4x32xf32> to vector<32xf32>
    %92 = vector.shape_cast %91 : vector<32xf32> to vector<1x32xf32>
    %cst_47 = arith.constant dense<0.000000e+00> : vector<1x32xf32>
    %93 = tpu.matmul %92, %84, %cst_47 {dimension_numbers = #tpu.dot_dimension_numbers<[1], [0], [0], [1], [0, 0, 1, 1], [], []>} : vector<1x32xf32>, vector<32x32xf32>, vector<1x32xf32> -> vector<1x32xf32>
    %c472 = arith.constant 472 : index
    %c0_48 = arith.constant 0 : index
    %94 = vector.load %arg2[%c472, %c0_48] : memref<512x384xf32, #tpu.memory_space<vmem>>, vector<1x32xf32>
    %cst_49 = arith.constant 9.99999974E-6 : f32
    %95 = vector.broadcast %cst_49 : f32 to vector<1x32xf32>
    %96 = arith.addf %93, %95 : vector<1x32xf32>
    %97 = math.rsqrt %96 : vector<1x32xf32>
    %98 = arith.mulf %94, %97 : vector<1x32xf32>
    %99 = vector.broadcast %98 : vector<1x32xf32> to vector<4x32xf32>
    %100 = arith.mulf %99, %89 : vector<4x32xf32>
    %c480 = arith.constant 480 : index
    %c0_50 = arith.constant 0 : index
    %101 = vector.load %arg2[%c480, %c0_50] : memref<512x384xf32, #tpu.memory_space<vmem>>, vector<1x32xf32>
    %102 = vector.broadcast %101 : vector<1x32xf32> to vector<4x32xf32>
    %103 = arith.addf %100, %102 : vector<4x32xf32>
    %cst_51 = arith.constant 0.000000e+00 : f32
    %104 = vector.broadcast %cst_51 : f32 to vector<4x32xf32>
    %105 = arith.maximumf %103, %104 : vector<4x32xf32>
    %106 = vector.extract_strided_slice %105 {offsets = [0, 0], sizes = [4, 16], strides = [1, 1]} : vector<4x32xf32> to vector<4x16xf32>
    %107 = vector.extract_strided_slice %105 {offsets = [0, 16], sizes = [4, 16], strides = [1, 1]} : vector<4x32xf32> to vector<4x16xf32>
    %108 = arith.maximumf %106, %107 : vector<4x16xf32>
    %109 = tpu.iota {dimensions = array<i32: 0>} : vector<2x16xi32>
    %cst_52 = arith.constant 0.000000e+00 : f32
    %110 = vector.broadcast %cst_52 : f32 to vector<2x16xf32>
    %111 = vector.extract_strided_slice %108 {offsets = [0, 0], sizes = [2, 16], strides = [1, 1]} : vector<4x16xf32> to vector<2x16xf32>
    %cst_53 = arith.constant dense<0xFF800000> : vector<16xf32>
    %112 = vector.multi_reduction <maximumf>, %111, %cst_53 [0] : vector<2x16xf32> to vector<16xf32>
    %113 = vector.shape_cast %112 : vector<16xf32> to vector<1x16xf32>
    %c0_i32 = arith.constant 0 : i32
    %114 = vector.broadcast %c0_i32 : i32 to vector<2x16xi32>
    %115 = arith.cmpi eq, %109, %114 : vector<2x16xi32>
    %116 = vector.shape_cast %113 : vector<1x16xf32> to vector<1x16xf32>
    %117 = vector.broadcast %116 : vector<1x16xf32> to vector<2x16xf32>
    %118 = arith.select %115, %117, %110 : vector<2x16xi1>, vector<2x16xf32>
    %119 = vector.extract_strided_slice %108 {offsets = [2, 0], sizes = [2, 16], strides = [1, 1]} : vector<4x16xf32> to vector<2x16xf32>
    %cst_54 = arith.constant dense<0xFF800000> : vector<16xf32>
    %120 = vector.multi_reduction <maximumf>, %119, %cst_54 [0] : vector<2x16xf32> to vector<16xf32>
    %121 = vector.shape_cast %120 : vector<16xf32> to vector<1x16xf32>
    %c1_i32 = arith.constant 1 : i32
    %122 = vector.broadcast %c1_i32 : i32 to vector<2x16xi32>
    %123 = arith.cmpi eq, %109, %122 : vector<2x16xi32>
    %124 = vector.shape_cast %121 : vector<1x16xf32> to vector<1x16xf32>
    %125 = vector.broadcast %124 : vector<1x16xf32> to vector<2x16xf32>
    %126 = arith.select %123, %125, %118 : vector<2x16xi1>, vector<2x16xf32>
    %c488 = arith.constant 488 : index
    %c0_55 = arith.constant 0 : index
    %127 = vector.load %arg2[%c488, %c0_55] : memref<512x384xf32, #tpu.memory_space<vmem>>, vector<16x32xf32>
    %cst_56 = arith.constant dense<0.000000e+00> : vector<2x32xf32>
    %128 = tpu.matmul %126, %127, %cst_56 {dimension_numbers = #tpu.dot_dimension_numbers<[1], [0], [0], [1], [0, 0, 1, 1], [], []>} : vector<2x16xf32>, vector<16x32xf32>, vector<2x32xf32> -> vector<2x32xf32>
    %c504 = arith.constant 504 : index
    %c0_57 = arith.constant 0 : index
    %129 = vector.load %arg2[%c504, %c0_57] : memref<512x384xf32, #tpu.memory_space<vmem>>, vector<1x32xf32>
    %130 = vector.broadcast %129 : vector<1x32xf32> to vector<2x32xf32>
    %131 = arith.addf %128, %130 : vector<2x32xf32>
    %c0_58 = arith.constant 0 : index
    %c0_59 = arith.constant 0 : index
    %132 = vector.load %arg3[%c0_58, %c0_59] : memref<2x32xf32, #tpu.memory_space<vmem>>, vector<2x32xf32>
    tpu.vector_store %arg3[%c0_58, %c0_59], %131 {strides = array<i32>} : memref<2x32xf32, #tpu.memory_space<vmem>>, vector<2x32xf32>,
    return
  }
  func.func @transform_0(%arg0: i32) -> (i32, i32) {
    %c0_i32 = arith.constant 0 : i32
    %c0_i32_0 = arith.constant 0 : i32
    %c0_i32_1 = arith.constant 0 : i32
    return %c0_i32, %c0_i32_0 : i32, i32
  }
  func.func @transform_1(%arg0: i32) -> (i32, i32) {
    %c0_i32 = arith.constant 0 : i32
    %c0_i32_0 = arith.constant 0 : i32
    %c0_i32_1 = arith.constant 0 : i32
    return %c0_i32, %c0_i32_0 : i32, i32
  }
  func.func @transform_2(%arg0: i32) -> (i32, i32) {
    %c0_i32 = arith.constant 0 : i32
    %c0_i32_0 = arith.constant 0 : i32
    %c0_i32_1 = arith.constant 0 : i32
    return %c0_i32, %c0_i32_0 : i32, i32
  }
}

</mosaic_0001>

<llo_original>
// kernel: forward.1
$region0: #{forward.1}
  #allocation0 [shape = 'u32[]', space=smem, size = 0x4, offset = 0x4, fixed_abs, tag = 'smem constant byte address 0x4 - core index']
  #allocation1 [shape = 'u32[144,128]{1,0:T(1,128)}', space=vmem, size = 0x12000, scoped, tag = 'internal scratch']
  %s0 = inlined_call_operand.vmem [shape: f32[58,29], index: 0, kind: input, shape index: {}]
  %s1 = inlined_call_operand.hbm [shape: f32[512,384], index: 1, kind: input, shape index: {}]
  %s2 = inlined_call_operand.hbm [shape: f32[2,32], index: 2, kind: output, shape index: {}]
  %s3 = sld [smem:[#allocation0]]
  $region22: #{forward.1} parent=0
    _
  %s5 = ssub.s32 1, %s3
  %s6 = scalar_select 0, %s5, %s3
  $region1: #{forward.1} parent=0
    #allocation2 [shape = 'u8[786432]{0}', space=vmem, size = 0xc0000, scoped, tag = 'input window, operand 1, single buffered']
    #allocation3 [shape = 's32[1]{0}', space=sflag, size = 0x4, scoped, tag = 'scoped memory for forward.1']
    #allocation4 [shape = 's32[1]{0}', space=sflag, size = 0x4, scoped, tag = 'scoped memory for forward.1']
    #allocation5 [shape = 'u8[1024]{0}', space=vmem, size = 0x400, scoped, tag = 'output window, operand 0, single buffered']
    %7 = vsyncpa [#allocation3], 0
    %8 = vsyncpa [#allocation4], 0
    // Predicated region
    $region2: #{forward.1} parent=1 // pred_check
      _
    $region3: #{forward.1} parent=1 // pred_check_branch
      %10 = sbr.rel (0) target = $region5
    $region4: #{forward.1} parent=1 // pred_region
      _
    $region5: #{forward.1} parent=1 // pred_fallthru
      _
    // Predicated region
    $region6: #{forward.1} parent=1 // pred_check
      _
    $region7: #{forward.1} parent=1 // pred_check_branch
      %12 = sbr.rel (0) target = $region9
    $region8: #{forward.1} parent=1 // pred_region
      %s14 = ssub.s32 24576, 24576
      %15 = vsyncadd [#allocation3], %s14
      %s16 = sshll.u32 [#allocation2], 4
      %s17 = int_to_ptr.vmem [resolvable:$true] %s16
      %22 = dma.hbm_to_vmem [thread:$0]  %s1, 24576, %s17, [#allocation3], 384, 384, 24
    $region9: #{forward.1} parent=1 // pred_fallthru
      _
    // Predicated region
    $region10: #{forward.1} parent=1 // pred_check
      _
    $region11: #{forward.1} parent=1 // pred_check_branch
      %24 = sbr.rel (0) target = $region13
    $region12: #{forward.1} parent=1 // pred_region
      %25 = dma.done [#allocation3], 24576
    $region13: #{forward.1} parent=1 // pred_fallthru
      _
    %v26 = vld [vmem:[%s0] sm:$0xff]
    %v27 = vld [vmem:[%s0 + $0x8] sm:$0xff]
    %v28 = vld [vmem:[%s0 + $0x10] sm:$0xff]
    %v29 = vld [vmem:[%s0 + $0x18] sm:$0xff]
    %v30 = vld [vmem:[%s0 + $0x20] sm:$0xff]
    %v31 = vld [vmem:[%s0 + $0x28] sm:$0xff]
    %v32 = vld [vmem:[%s0 + $0x30] sm:$0xff]
    %v33 = vld [vmem:[%s0 + $0x38] sm:$0x3]
    %v34 = vld [vmem:[#allocation2 + $0x120] sm:$0xff]
    %v35 = vld [vmem:[#allocation2 + $0x128] sm:$0xff]
    %v36 = vld [vmem:[#allocation2 + $0x130] sm:$0xff]
    %v37 = vld [vmem:[#allocation2 + $0x138] sm:$0xff]
    %v38 = vld [vmem:[#allocation2 + $0x140] sm:$0xff]
    %v39 = vld [vmem:[#allocation2 + $0x148] sm:$0xff]
    %v40 = vld [vmem:[#allocation2 + $0x150] sm:$0xff]
    %v41 = vld [vmem:[#allocation2 + $0x158] sm:$0xff]
    %v42 = vld [vmem:[#allocation2 + $0x160] sm:$0xff]
    %v43 = vld [vmem:[#allocation2 + $0x168] sm:$0x1f]
    %v44 = vld [vmem:[#allocation2 + $0x170] sm:$0x1f]
    %v45 = vld [vmem:[#allocation2 + $0x178] sm:$0x1f]
    %vm46 = vcmask 236544
    %v48 = vsel %vm46, %v26, 0
    %v51 = vsel %vm46, %v27, 0
    %v54 = vsel %vm46, %v28, 0
    %v57 = vsel %vm46, %v29, 0
    %v60 = vsel %vm46, %v30, 0
    %v63 = vsel %vm46, %v31, 0
    %v66 = vsel %vm46, %v32, 0
    %v69 = vsel %vm46, %v33, 0
    %vm71 = vcmask 1044480
    %v73 = vsel %vm71, %v43, 0
    %v76 = vsel %vm71, %v44, 0
    %v79 = vsel %vm71, %v45, 0
    %81 = vmatprep.subr.mxu0 0.0
    %82 = vmatpush1.msra.mxu0 0.0
    %83 = vmatprep.subr.mxu0 0.0
    %84 = vmatpush1.msra.mxu0 0.0
    %85 = vmatprep.subr.mxu0 0.0
    %86 = vmatpush1.msra.mxu0 0.0
    %87 = vmatprep.subr.mxu0 0.0
    %88 = vmatpush1.msra.mxu0 0.0
    %89 = vmatprep.subr.mxu0 0.0
    %90 = vmatpush1.msra.mxu0 0.0
    %91 = vmatprep.subr.mxu0 0.0
    %92 = vmatpush1.msra.mxu0 0.0
    %93 = vmatprep.subr.mxu0 0.0
    %94 = vmatpush1.msra.mxu0 0.0
    %95 = vmatprep.subr.mxu0 0.0
    %96 = vmatpush1.msra.mxu0 0.0
    %97 = vmatprep.subr.mxu0 0.0
    %98 = vmatpush1.msra.mxu0 0.0
    %99 = vmatprep.subr.mxu0 0.0
    %100 = vmatpush1.msra.mxu0 0.0
    %101 = vmatprep.subr.mxu0 0.0
    %102 = vmatpush1.msra.mxu0 0.0
    %103 = vmatprep.subr.mxu0 0.0
    %104 = vmatpush1.msra.mxu0 0.0
    %105 = vmatprep.subr.mxu0 %v76
    %106 = vmatpush1.msra.mxu0 %v73
    %107 = vmatprep.subr.mxu0 %v41
    %108 = vmatpush1.msra.mxu0 %v40
    %109 = vmatprep.subr.mxu0 %v38
    %110 = vmatpush1.msra.mxu0 %v37
    %111 = vmatprep.subr.mxu0 %v35
    %112 = vmatpush1.msra.mxu0 %v34
    %113 = vmatprep.subr.mxu0 0.0
    %114 = vmatpush2.msra.mxu0 0.0
    %115 = vmatprep.subr.mxu0 0.0
    %116 = vmatpush2.msra.mxu0 0.0
    %117 = vmatprep.subr.mxu0 0.0
    %118 = vmatpush2.msra.mxu0 0.0
    %119 = vmatprep.subr.mxu0 0.0
    %120 = vmatpush2.msra.mxu0 0.0
    %121 = vmatprep.subr.mxu0 0.0
    %122 = vmatpush2.msra.mxu0 0.0
    %123 = vmatprep.subr.mxu0 0.0
    %124 = vmatpush2.msra.mxu0 0.0
    %125 = vmatprep.subr.mxu0 0.0
    %126 = vmatpush2.msra.mxu0 0.0
    %127 = vmatprep.subr.mxu0 0.0
    %128 = vmatpush2.msra.mxu0 0.0
    %129 = vmatprep.subr.mxu0 0.0
    %130 = vmatpush2.msra.mxu0 0.0
    %131 = vmatprep.subr.mxu0 0.0
    %132 = vmatpush2.msra.mxu0 0.0
    %133 = vmatprep.subr.mxu0 0.0
    %134 = vmatpush2.msra.mxu0 0.0
    %135 = vmatprep.subr.mxu0 0.0
    %136 = vmatpush2.msra.mxu0 0.0
    %137 = vmatprep.subr.mxu0 0.0
    %138 = vmatpush2.msra.mxu0 0.0
    %139 = vmatprep.subr.mxu0 0.0
    %140 = vmatpush2.msra.mxu0 0.0
    %141 = vmatprep.subr.mxu0 0.0
    %142 = vmatpush2.msra.mxu0 0.0
    %143 = vmatprep.subr.mxu0 0.0
    %144 = vmatpush2.msra.mxu0 0.0
    %145 = vmatprep.mubr.f32.mxu0 0.0
    %146 = vmatmul.mubr.f32.gmra.mxu0 %v48
    %v147 = vpop.f32.mrf.mxu0
    %v148 = vadd.f32 0.0, %v147
    %v149 = vpop.f32.mrf.mxu0
    %v150 = vadd.f32 0.0, %v149
    %151 = vmatprep.mubr.f32.mxu0 0.0
    %152 = vmatmul.mubr.f32.gmra.mxu0 %v51
    %v153 = vpop.f32.mrf.mxu0
    %v154 = vadd.f32 0.0, %v153
    %v155 = vpop.f32.mrf.mxu0
    %v156 = vadd.f32 0.0, %v155
    %157 = vmatprep.mubr.f32.mxu0 0.0
    %158 = vmatmul.mubr.f32.gmra.mxu0 %v54
    %v159 = vpop.f32.mrf.mxu0
    %v160 = vadd.f32 0.0, %v159
    %v161 = vpop.f32.mrf.mxu0
    %v162 = vadd.f32 0.0, %v161
    %163 = vmatprep.mubr.f32.mxu0 0.0
    %164 = vmatmul.mubr.f32.gmra.mxu0 %v57
    %v165 = vpop.f32.mrf.mxu0
    %v166 = vadd.f32 0.0, %v165
    %v167 = vpop.f32.mrf.mxu0
    %v168 = vadd.f32 0.0, %v167
    %169 = vmatprep.mubr.f32.mxu0 0.0
    %170 = vmatmul.mubr.f32.gmra.mxu0 %v60
    %v171 = vpop.f32.mrf.mxu0
    %v172 = vadd.f32 0.0, %v171
    %v173 = vpop.f32.mrf.mxu0
    %v174 = vadd.f32 0.0, %v173
    %175 = vmatprep.mubr.f32.mxu0 0.0
    %176 = vmatmul.mubr.f32.gmra.mxu0 %v63
    %v177 = vpop.f32.mrf.mxu0
    %v178 = vadd.f32 0.0, %v177
    %v179 = vpop.f32.mrf.mxu0
    %v180 = vadd.f32 0.0, %v179
    %181 = vmatprep.mubr.f32.mxu0 0.0
    %182 = vmatmul.mubr.f32.gmra.mxu0 %v66
    %v183 = vpop.f32.mrf.mxu0
    %v184 = vadd.f32 0.0, %v183
    %v185 = vpop.f32.mrf.mxu0
    %v186 = vadd.f32 0.0, %v185
    %187 = vmatprep.mubr.f32.mxu0 0.0
    %188 = vmatmul.mubr.f32.gmra.mxu0 %v69
    %v189 = vpop.f32.mrf.mxu0
    %v190 = vadd.f32 0.0, %v189
    %v191 = vpop.f32.mrf.mxu0
    %v192 = vadd.f32 0.0, %v191
    %193 = vdwg.mxu0
    %194 = vmatprep.subr.mxu0 0.0
    %195 = vmatpush1.msra.mxu0 0.0
    %196 = vmatprep.subr.mxu0 0.0
    %197 = vmatpush1.msra.mxu0 0.0
    %198 = vmatprep.subr.mxu0 0.0
    %199 = vmatpush1.msra.mxu0 0.0
    %200 = vmatprep.subr.mxu0 0.0
    %201 = vmatpush1.msra.mxu0 0.0
    %202 = vmatprep.subr.mxu0 0.0
    %203 = vmatpush1.msra.mxu0 0.0
    %204 = vmatprep.subr.mxu0 0.0
    %205 = vmatpush1.msra.mxu0 0.0
    %206 = vmatprep.subr.mxu0 0.0
    %207 = vmatpush1.msra.mxu0 0.0
    %208 = vmatprep.subr.mxu0 0.0
    %209 = vmatpush1.msra.mxu0 0.0
    %210 = vmatprep.subr.mxu0 0.0
    %211 = vmatpush1.msra.mxu0 0.0
    %212 = vmatprep.subr.mxu0 0.0
    %213 = vmatpush1.msra.mxu0 0.0
    %214 = vmatprep.subr.mxu0 0.0
    %215 = vmatpush1.msra.mxu0 0.0
    %216 = vmatprep.subr.mxu0 0.0
    %217 = vmatpush1.msra.mxu0 0.0
    %218 = vmatprep.subr.mxu0 0.0
    %219 = vmatpush1.msra.mxu0 %v79
    %220 = vmatprep.subr.mxu0 0.0
    %221 = vmatpush1.msra.mxu0 %v42
    %222 = vmatprep.subr.mxu0 0.0
    %223 = vmatpush1.msra.mxu0 %v39
    %224 = vmatprep.subr.mxu0 0.0
    %225 = vmatpush1.msra.mxu0 %v36
    %226 = vmatprep.subr.mxu0 0.0
    %227 = vmatpush2.msra.mxu0 0.0
    %228 = vmatprep.subr.mxu0 0.0
    %229 = vmatpush2.msra.mxu0 0.0
    %230 = vmatprep.subr.mxu0 0.0
    %231 = vmatpush2.msra.mxu0 0.0
    %232 = vmatprep.subr.mxu0 0.0
    %233 = vmatpush2.msra.mxu0 0.0
    %234 = vmatprep.subr.mxu0 0.0
    %235 = vmatpush2.msra.mxu0 0.0
    %236 = vmatprep.subr.mxu0 0.0
    %237 = vmatpush2.msra.mxu0 0.0
    %238 = vmatprep.subr.mxu0 0.0
    %239 = vmatpush2.msra.mxu0 0.0
    %240 = vmatprep.subr.mxu0 0.0
    %241 = vmatpush2.msra.mxu0 0.0
    %242 = vmatprep.subr.mxu0 0.0
    %243 = vmatpush2.msra.mxu0 0.0
    %244 = vmatprep.subr.mxu0 0.0
    %245 = vmatpush2.msra.mxu0 0.0
    %246 = vmatprep.subr.mxu0 0.0
    %247 = vmatpush2.msra.mxu0 0.0
    %248 = vmatprep.subr.mxu0 0.0
    %249 = vmatpush2.msra.mxu0 0.0
    %250 = vmatprep.subr.mxu0 0.0
    %251 = vmatpush2.msra.mxu0 0.0
    %252 = vmatprep.subr.mxu0 0.0
    %253 = vmatpush2.msra.mxu0 0.0
    %254 = vmatprep.subr.mxu0 0.0
    %255 = vmatpush2.msra.mxu0 0.0
    %256 = vmatprep.subr.mxu0 0.0
    %257 = vmatpush2.msra.mxu0 0.0
    %258 = vmatprep.mubr.f32.mxu0 0.0
    %259 = vmatmul.mubr.f32.gmra.mxu0 %v48
    %v260 = vpop.f32.mrf.mxu0
    %v261 = vadd.f32 0.0, %v260
    %v262 = vpop.f32.mrf.mxu0
    %263 = vmatprep.mubr.f32.mxu0 0.0
    %264 = vmatmul.mubr.f32.gmra.mxu0 %v51
    %v265 = vpop.f32.mrf.mxu0
    %v266 = vadd.f32 0.0, %v265
    %v267 = vpop.f32.mrf.mxu0
    %268 = vmatprep.mubr.f32.mxu0 0.0
    %269 = vmatmul.mubr.f32.gmra.mxu0 %v54
    %v270 = vpop.f32.mrf.mxu0
    %v271 = vadd.f32 0.0, %v270
    %v272 = vpop.f32.mrf.mxu0
    %273 = vmatprep.mubr.f32.mxu0 0.0
    %274 = vmatmul.mubr.f32.gmra.mxu0 %v57
    %v275 = vpop.f32.mrf.mxu0
    %v276 = vadd.f32 0.0, %v275
    %v277 = vpop.f32.mrf.mxu0
    %278 = vmatprep.mubr.f32.mxu0 0.0
    %279 = vmatmul.mubr.f32.gmra.mxu0 %v60
    %v280 = vpop.f32.mrf.mxu0
    %v281 = vadd.f32 0.0, %v280
    %v282 = vpop.f32.mrf.mxu0
    %283 = vmatprep.mubr.f32.mxu0 0.0
    %284 = vmatmul.mubr.f32.gmra.mxu0 %v63
    %v285 = vpop.f32.mrf.mxu0
    %v286 = vadd.f32 0.0, %v285
    %v287 = vpop.f32.mrf.mxu0
    %288 = vmatprep.mubr.f32.mxu0 0.0
    %289 = vmatmul.mubr.f32.gmra.mxu0 %v66
    %v290 = vpop.f32.mrf.mxu0
    %v291 = vadd.f32 0.0, %v290
    %v292 = vpop.f32.mrf.mxu0
    %293 = vmatprep.mubr.f32.mxu0 0.0
    %294 = vmatmul.mubr.f32.gmra.mxu0 %v69
    %v295 = vpop.f32.mrf.mxu0
    %v296 = vadd.f32 0.0, %v295
    %v297 = vpop.f32.mrf.mxu0
    %298 = vdwg.mxu0
    %v299 = vld [vmem:[#allocation2] sm:$0xff]
    %v300 = vld [vmem:[#allocation2 + $0x18] sm:$0xff]
    %v301 = vld [vmem:[#allocation2 + $0x30] sm:$0xff]
    %v302 = vld [vmem:[#allocation2 + $0x48] sm:$0xf]
    %v303 = vld [vmem:[#allocation2 + $0x60] sm:$0xff]
    %v304 = vld [vmem:[#allocation2 + $0x78] sm:$0xff]
    %v305 = vld [vmem:[#allocation2 + $0x90] sm:$0xff]
    %v306 = vld [vmem:[#allocation2 + $0xa8] sm:$0xf]
    %vm307 = vcmask 474112
    %v309 = vsel %vm307, %v303, 0
    %v312 = vsel %vm307, %v304, 0
    %v315 = vsel %vm307, %v305, 0
    %v318 = vsel %vm307, %v306, 0
    %vm320 = vcmask 1041408
    %v322 = vsel %vm320, %v192, 0
    %324 = vmatprep.subr.mxu0 0.0
    %325 = vmatpush1.msra.mxu0 0.0
    %326 = vmatprep.subr.mxu0 0.0
    %327 = vmatpush1.msra.mxu0 0.0
    %328 = vmatprep.subr.mxu0 0.0
    %329 = vmatpush1.msra.mxu0 0.0
    %330 = vmatprep.subr.mxu0 0.0
    %331 = vmatpush1.msra.mxu0 0.0
    %332 = vmatprep.subr.mxu0 0.0
    %333 = vmatpush1.msra.mxu0 0.0
    %334 = vmatprep.subr.mxu0 0.0
    %335 = vmatpush1.msra.mxu0 0.0
    %336 = vmatprep.subr.mxu0 0.0
    %337 = vmatpush1.msra.mxu0 0.0
    %338 = vmatprep.subr.mxu0 0.0
    %339 = vmatpush1.msra.mxu0 0.0
    %340 = vmatprep.subr.mxu0 0.0
    %341 = vmatpush1.msra.mxu0 %v322
    %342 = vmatprep.subr.mxu0 0.0
    %343 = vmatpush1.msra.mxu0 %v186
    %344 = vmatprep.subr.mxu0 0.0
    %345 = vmatpush1.msra.mxu0 %v180
    %346 = vmatprep.subr.mxu0 0.0
    %347 = vmatpush1.msra.mxu0 %v174
    %348 = vmatprep.subr.mxu0 0.0
    %349 = vmatpush1.msra.mxu0 %v168
    %350 = vmatprep.subr.mxu0 0.0
    %351 = vmatpush1.msra.mxu0 %v162
    %352 = vmatprep.subr.mxu0 0.0
    %353 = vmatpush1.msra.mxu0 %v156
    %354 = vmatprep.subr.mxu0 0.0
    %355 = vmatpush1.msra.mxu0 %v150
    %356 = vmatprep.subr.mxu0 0.0
    %357 = vmatpush2.msra.mxu0 0.0
    %358 = vmatprep.subr.mxu0 0.0
    %359 = vmatpush2.msra.mxu0 0.0
    %360 = vmatprep.subr.mxu0 0.0
    %361 = vmatpush2.msra.mxu0 0.0
    %362 = vmatprep.subr.mxu0 0.0
    %363 = vmatpush2.msra.mxu0 0.0
    %364 = vmatprep.subr.mxu0 0.0
    %365 = vmatpush2.msra.mxu0 0.0
    %366 = vmatprep.subr.mxu0 0.0
    %367 = vmatpush2.msra.mxu0 0.0
    %368 = vmatprep.subr.mxu0 0.0
    %369 = vmatpush2.msra.mxu0 0.0
    %370 = vmatprep.subr.mxu0 0.0
    %371 = vmatpush2.msra.mxu0 0.0
    %372 = vmatprep.subr.mxu0 0.0
    %373 = vmatpush2.msra.mxu0 0.0
    %374 = vmatprep.subr.mxu0 0.0
    %375 = vmatpush2.msra.mxu0 0.0
    %376 = vmatprep.subr.mxu0 0.0
    %377 = vmatpush2.msra.mxu0 0.0
    %378 = vmatprep.subr.mxu0 0.0
    %379 = vmatpush2.msra.mxu0 0.0
    %380 = vmatprep.subr.mxu0 0.0
    %381 = vmatpush2.msra.mxu0 0.0
    %382 = vmatprep.subr.mxu0 0.0
    %383 = vmatpush2.msra.mxu0 0.0
    %384 = vmatprep.subr.mxu0 0.0
    %385 = vmatpush2.msra.mxu0 0.0
    %386 = vmatprep.subr.mxu0 0.0
    %387 = vmatpush2.msra.mxu0 0.0
    %388 = vmatprep.mubr.f32.mxu0 0.0
    %389 = vmatmul.mubr.f32.gmra.mxu0 %v309
    %v390 = vpop.f32.mrf.mxu0
    %v391 = vadd.f32 0.0, %v390
    %v392 = vpop.f32.mrf.mxu0
    %393 = vmatprep.mubr.f32.mxu0 0.0
    %394 = vmatmul.mubr.f32.gmra.mxu0 %v312
    %v395 = vpop.f32.mrf.mxu0
    %v396 = vadd.f32 0.0, %v395
    %v397 = vpop.f32.mrf.mxu0
    %398 = vmatprep.mubr.f32.mxu0 0.0
    %399 = vmatmul.mubr.f32.gmra.mxu0 %v315
    %v400 = vpop.f32.mrf.mxu0
    %v401 = vadd.f32 0.0, %v400
    %v402 = vpop.f32.mrf.mxu0
    %403 = vmatprep.mubr.f32.mxu0 0.0
    %404 = vmatmul.mubr.f32.gmra.mxu0 %v318
    %v405 = vpop.f32.mrf.mxu0
    %v406 = vadd.f32 0.0, %v405
    %v407 = vpop.f32.mrf.mxu0
    %408 = vdwg.mxu0
    %v410 = vsel %vm307, %v299, 0
    %v413 = vsel %vm307, %v300, 0
    %v416 = vsel %vm307, %v301, 0
    %v419 = vsel %vm307, %v302, 0
    %v422 = vsel %vm320, %v190, 0
    %424 = vmatprep.subr.mxu0 0.0
    %425 = vmatpush1.msra.mxu0 0.0
    %426 = vmatprep.subr.mxu0 0.0
    %427 = vmatpush1.msra.mxu0 0.0
    %428 = vmatprep.subr.mxu0 0.0
    %429 = vmatpush1.msra.mxu0 0.0
    %430 = vmatprep.subr.mxu0 0.0
    %431 = vmatpush1.msra.mxu0 0.0
    %432 = vmatprep.subr.mxu0 0.0
    %433 = vmatpush1.msra.mxu0 0.0
    %434 = vmatprep.subr.mxu0 0.0
    %435 = vmatpush1.msra.mxu0 0.0
    %436 = vmatprep.subr.mxu0 0.0
    %437 = vmatpush1.msra.mxu0 0.0
    %438 = vmatprep.subr.mxu0 0.0
    %439 = vmatpush1.msra.mxu0 0.0
    %440 = vmatprep.subr.mxu0 0.0
    %441 = vmatpush1.msra.mxu0 %v422
    %442 = vmatprep.subr.mxu0 0.0
    %443 = vmatpush1.msra.mxu0 %v184
    %444 = vmatprep.subr.mxu0 0.0
    %445 = vmatpush1.msra.mxu0 %v178
    %446 = vmatprep.subr.mxu0 0.0
    %447 = vmatpush1.msra.mxu0 %v172
    %448 = vmatprep.subr.mxu0 0.0
    %449 = vmatpush1.msra.mxu0 %v166
    %450 = vmatprep.subr.mxu0 0.0
    %451 = vmatpush1.msra.mxu0 %v160
    %452 = vmatprep.subr.mxu0 0.0
    %453 = vmatpush1.msra.mxu0 %v154
    %454 = vmatprep.subr.mxu0 0.0
    %455 = vmatpush1.msra.mxu0 %v148
    %456 = vmatprep.subr.mxu0 0.0
    %457 = vmatpush2.msra.mxu0 0.0
    %458 = vmatprep.subr.mxu0 0.0
    %459 = vmatpush2.msra.mxu0 0.0
    %460 = vmatprep.subr.mxu0 0.0
    %461 = vmatpush2.msra.mxu0 0.0
    %462 = vmatprep.subr.mxu0 0.0
    %463 = vmatpush2.msra.mxu0 0.0
    %464 = vmatprep.subr.mxu0 0.0
    %465 = vmatpush2.msra.mxu0 0.0
    %466 = vmatprep.subr.mxu0 0.0
    %467 = vmatpush2.msra.mxu0 0.0
    %468 = vmatprep.subr.mxu0 0.0
    %469 = vmatpush2.msra.mxu0 0.0
    %470 = vmatprep.subr.mxu0 0.0
    %471 = vmatpush2.msra.mxu0 0.0
    %472 = vmatprep.subr.mxu0 0.0
    %473 = vmatpush2.msra.mxu0 0.0
    %474 = vmatprep.subr.mxu0 0.0
    %475 = vmatpush2.msra.mxu0 0.0
    %476 = vmatprep.subr.mxu0 0.0
    %477 = vmatpush2.msra.mxu0 0.0
    %478 = vmatprep.subr.mxu0 0.0
    %479 = vmatpush2.msra.mxu0 0.0
    %480 = vmatprep.subr.mxu0 0.0
    %481 = vmatpush2.msra.mxu0 0.0
    %482 = vmatprep.subr.mxu0 0.0
    %483 = vmatpush2.msra.mxu0 0.0
    %484 = vmatprep.subr.mxu0 0.0
    %485 = vmatpush2.msra.mxu0 0.0
    %486 = vmatprep.subr.mxu0 0.0
    %487 = vmatpush2.msra.mxu0 0.0
    %488 = vmatprep.mubr.f32.mxu0 0.0
    %489 = vmatmul.mubr.f32.gmra.mxu0 %v410
    %v490 = vpop.f32.mrf.mxu0
    %v491 = vadd.f32 %v391, %v490
    %v492 = vpop.f32.mrf.mxu0
    %493 = vmatprep.mubr.f32.mxu0 0.0
    %494 = vmatmul.mubr.f32.gmra.mxu0 %v413
    %v495 = vpop.f32.mrf.mxu0
    %v496 = vadd.f32 %v396, %v495
    %v497 = vpop.f32.mrf.mxu0
    %498 = vmatprep.mubr.f32.mxu0 0.0
    %499 = vmatmul.mubr.f32.gmra.mxu0 %v416
    %v500 = vpop.f32.mrf.mxu0
    %v501 = vadd.f32 %v401, %v500
    %v502 = vpop.f32.mrf.mxu0
    %503 = vmatprep.mubr.f32.mxu0 0.0
    %504 = vmatmul.mubr.f32.gmra.mxu0 %v419
    %v505 = vpop.f32.mrf.mxu0
    %v506 = vadd.f32 %v406, %v505
    %v507 = vpop.f32.mrf.mxu0
    %508 = vdwg.mxu0
    %v509 = vld [vmem:[#allocation2 + $0xc0] sm:$0xff]
    %v510 = vld [vmem:[#allocation2 + $0xd8] sm:$0xff]
    %v511 = vld [vmem:[#allocation2 + $0xf0] sm:$0xff]
    %v512 = vld [vmem:[#allocation2 + $0x108] sm:$0xf]
    %v514 = vsel %vm307, %v509, 0
    %v517 = vsel %vm307, %v510, 0
    %v520 = vsel %vm307, %v511, 0
    %v523 = vsel %vm307, %v512, 0
    %v526 = vsel %vm320, %v296, 0
    %528 = vmatprep.subr.mxu0 0.0
    %529 = vmatpush1.msra.mxu0 0.0
    %530 = vmatprep.subr.mxu0 0.0
    %531 = vmatpush1.msra.mxu0 0.0
    %532 = vmatprep.subr.mxu0 0.0
    %533 = vmatpush1.msra.mxu0 0.0
    %534 = vmatprep.subr.mxu0 0.0
    %535 = vmatpush1.msra.mxu0 0.0
    %536 = vmatprep.subr.mxu0 0.0
    %537 = vmatpush1.msra.mxu0 0.0
    %538 = vmatprep.subr.mxu0 0.0
    %539 = vmatpush1.msra.mxu0 0.0
    %540 = vmatprep.subr.mxu0 0.0
    %541 = vmatpush1.msra.mxu0 0.0
    %542 = vmatprep.subr.mxu0 0.0
    %543 = vmatpush1.msra.mxu0 0.0
    %544 = vmatprep.subr.mxu0 0.0
    %545 = vmatpush1.msra.mxu0 %v526
    %546 = vmatprep.subr.mxu0 0.0
    %547 = vmatpush1.msra.mxu0 %v291
    %548 = vmatprep.subr.mxu0 0.0
    %549 = vmatpush1.msra.mxu0 %v286
    %550 = vmatprep.subr.mxu0 0.0
    %551 = vmatpush1.msra.mxu0 %v281
    %552 = vmatprep.subr.mxu0 0.0
    %553 = vmatpush1.msra.mxu0 %v276
    %554 = vmatprep.subr.mxu0 0.0
    %555 = vmatpush1.msra.mxu0 %v271
    %556 = vmatprep.subr.mxu0 0.0
    %557 = vmatpush1.msra.mxu0 %v266
    %558 = vmatprep.subr.mxu0 0.0
    %559 = vmatpush1.msra.mxu0 %v261
    %560 = vmatprep.subr.mxu0 0.0
    %561 = vmatpush2.msra.mxu0 0.0
    %562 = vmatprep.subr.mxu0 0.0
    %563 = vmatpush2.msra.mxu0 0.0
    %564 = vmatprep.subr.mxu0 0.0
    %565 = vmatpush2.msra.mxu0 0.0
    %566 = vmatprep.subr.mxu0 0.0
    %567 = vmatpush2.msra.mxu0 0.0
    %568 = vmatprep.subr.mxu0 0.0
    %569 = vmatpush2.msra.mxu0 0.0
    %570 = vmatprep.subr.mxu0 0.0
    %571 = vmatpush2.msra.mxu0 0.0
    %572 = vmatprep.subr.mxu0 0.0
    %573 = vmatpush2.msra.mxu0 0.0
    %574 = vmatprep.subr.mxu0 0.0
    %575 = vmatpush2.msra.mxu0 0.0
    %576 = vmatprep.subr.mxu0 0.0
    %577 = vmatpush2.msra.mxu0 0.0
    %578 = vmatprep.subr.mxu0 0.0
    %579 = vmatpush2.msra.mxu0 0.0
    %580 = vmatprep.subr.mxu0 0.0
    %581 = vmatpush2.msra.mxu0 0.0
    %582 = vmatprep.subr.mxu0 0.0
    %583 = vmatpush2.msra.mxu0 0.0
    %584 = vmatprep.subr.mxu0 0.0
    %585 = vmatpush2.msra.mxu0 0.0
    %586 = vmatprep.subr.mxu0 0.0
    %587 = vmatpush2.msra.mxu0 0.0
    %588 = vmatprep.subr.mxu0 0.0
    %589 = vmatpush2.msra.mxu0 0.0
    %590 = vmatprep.subr.mxu0 0.0
    %591 = vmatpush2.msra.mxu0 0.0
    %592 = vmatprep.mubr.f32.mxu0 0.0
    %593 = vmatmul.mubr.f32.gmra.mxu0 %v514
    %v594 = vpop.f32.mrf.mxu0
    %v595 = vadd.f32 0.0, %v594
    %v596 = vpop.f32.mrf.mxu0
    %597 = vmatprep.mubr.f32.mxu0 0.0
    %598 = vmatmul.mubr.f32.gmra.mxu0 %v517
    %v599 = vpop.f32.mrf.mxu0
    %v600 = vadd.f32 0.0, %v599
    %v601 = vpop.f32.mrf.mxu0
    %602 = vmatprep.mubr.f32.mxu0 0.0
    %603 = vmatmul.mubr.f32.gmra.mxu0 %v520
    %v604 = vpop.f32.mrf.mxu0
    %v605 = vadd.f32 0.0, %v604
    %v606 = vpop.f32.mrf.mxu0
    %607 = vmatprep.mubr.f32.mxu0 0.0
    %608 = vmatmul.mubr.f32.gmra.mxu0 %v523
    %v609 = vpop.f32.mrf.mxu0
    %v610 = vadd.f32 0.0, %v609
    %v611 = vpop.f32.mrf.mxu0
    %612 = vdwg.mxu0
    %v613 = vadd.f32 %v491, %v595
    %v614 = vadd.f32 %v496, %v600
    %v615 = vadd.f32 %v501, %v605
    %v616 = vadd.f32 %v506, %v610
    %v617 = vld [vmem:[#allocation2 + $0x180] sm:$0xff]
    %v618 = vld [vmem:[#allocation2 + $0x198] sm:$0xff]
    %v619 = vld [vmem:[#allocation2 + $0x1b0] sm:$0xff]
    %v620 = vld [vmem:[#allocation2 + $0x1c8] sm:$0xff]
    %v621 = vld [vmem:[#allocation2 + $0x1e0] sm:$0xff]
    %v622 = vld [vmem:[#allocation2 + $0x1f8] sm:$0xff]
    %v623 = vld [vmem:[#allocation2 + $0x210] sm:$0xff]
    %vm624 = vcmask 457728
    %v625 = vsel %vm624, %v613, 0.0
    %v626 = vsel %vm624, %v614, 0.0
    %v627 = vadd.f32 %v625, %v626
    %v628 = vsel %vm624, %v615, 0.0
    %v629 = vadd.f32 %v627, %v628
    %vm630 = vcmask 453632
    %v631 = vsel %vm630, %v616, 0.0
    %v632 = vadd.f32 %v629, %v631
    %v633 = vrot.slane %v632, 4
    %v634 = vadd.f32 %v632, %v633
    %v635 = vrot.slane %v634, 2
    %v636 = vadd.f32 %v634, %v635
    %v637 = vrot.slane %v636, 1
    %v638 = vadd.f32 %v636, %v637
    %v640 = vsel %vm624, %v638, 0
    %642 = vmatprep.subr.mxu0 0.0
    %643 = vmatpush1.msra.mxu0 0.0
    %644 = vmatprep.subr.mxu0 0.0
    %645 = vmatpush1.msra.mxu0 0.0
    %646 = vmatprep.subr.mxu0 0.0
    %647 = vmatpush1.msra.mxu0 0.0
    %648 = vmatprep.subr.mxu0 0.0
    %649 = vmatpush1.msra.mxu0 0.0
    %650 = vmatprep.subr.mxu0 0.0
    %651 = vmatpush1.msra.mxu0 0.0
    %652 = vmatprep.subr.mxu0 0.0
    %653 = vmatpush1.msra.mxu0 0.0
    %654 = vmatprep.subr.mxu0 0.0
    %655 = vmatpush1.msra.mxu0 0.0
    %656 = vmatprep.subr.mxu0 0.0
    %657 = vmatpush1.msra.mxu0 0.0
    %658 = vmatprep.subr.mxu0 0.0
    %659 = vmatpush1.msra.mxu0 0.0
    %660 = vmatprep.subr.mxu0 0.0
    %661 = vmatpush1.msra.mxu0 %v623
    %662 = vmatprep.subr.mxu0 0.0
    %663 = vmatpush1.msra.mxu0 %v622
    %664 = vmatprep.subr.mxu0 0.0
    %665 = vmatpush1.msra.mxu0 %v621
    %666 = vmatprep.subr.mxu0 0.0
    %667 = vmatpush1.msra.mxu0 %v620
    %668 = vmatprep.subr.mxu0 0.0
    %669 = vmatpush1.msra.mxu0 %v619
    %670 = vmatprep.subr.mxu0 0.0
    %671 = vmatpush1.msra.mxu0 %v618
    %672 = vmatprep.subr.mxu0 0.0
    %673 = vmatpush1.msra.mxu0 %v617
    %674 = vmatprep.subr.mxu0 0.0
    %675 = vmatpush2.msra.mxu0 0.0
    %676 = vmatprep.subr.mxu0 0.0
    %677 = vmatpush2.msra.mxu0 0.0
    %678 = vmatprep.subr.mxu0 0.0
    %679 = vmatpush2.msra.mxu0 0.0
    %680 = vmatprep.subr.mxu0 0.0
    %681 = vmatpush2.msra.mxu0 0.0
    %682 = vmatprep.subr.mxu0 0.0
    %683 = vmatpush2.msra.mxu0 0.0
    %684 = vmatprep.subr.mxu0 0.0
    %685 = vmatpush2.msra.mxu0 0.0
    %686 = vmatprep.subr.mxu0 0.0
    %687 = vmatpush2.msra.mxu0 0.0
    %688 = vmatprep.subr.mxu0 0.0
    %689 = vmatpush2.msra.mxu0 0.0
    %690 = vmatprep.subr.mxu0 0.0
    %691 = vmatpush2.msra.mxu0 0.0
    %692 = vmatprep.subr.mxu0 0.0
    %693 = vmatpush2.msra.mxu0 0.0
    %694 = vmatprep.subr.mxu0 0.0
    %695 = vmatpush2.msra.mxu0 0.0
    %696 = vmatprep.subr.mxu0 0.0
    %697 = vmatpush2.msra.mxu0 0.0
    %698 = vmatprep.subr.mxu0 0.0
    %699 = vmatpush2.msra.mxu0 0.0
    %700 = vmatprep.subr.mxu0 0.0
    %701 = vmatpush2.msra.mxu0 0.0
    %702 = vmatprep.subr.mxu0 0.0
    %703 = vmatpush2.msra.mxu0 0.0
    %704 = vmatprep.subr.mxu0 0.0
    %705 = vmatpush2.msra.mxu0 0.0
    %706 = vmatprep.mubr.f32.mxu0 0.0
    %707 = vmatmul.mubr.f32.gmra.mxu0 %v640
    %v708 = vpop.f32.mrf.mxu0
    %v709 = vadd.f32 0.0, %v708
    %v710 = vpop.f32.mrf.mxu0
    %711 = vdwg.mxu0
    %v712 = vlaneseq
    %v713 = vshrl.u32 %v712, 7
    %v714 = vsub.s32 0, %v713
    %v715 = vrot.slane %v709, %v714
    %v716 = vsub.f32 %v613, %v715
    %v717 = vsub.f32 %v614, %v715
    %v718 = vsub.f32 %v615, %v715
    %v719 = vsub.f32 %v616, %v715
    %v720 = vmul.f32 %v716, %v716
    %v721 = vmul.f32 %v717, %v717
    %v722 = vmul.f32 %v718, %v718
    %v723 = vmul.f32 %v719, %v719
    %v724 = vsel %vm624, %v720, 0.0
    %v725 = vsel %vm624, %v721, 0.0
    %v726 = vadd.f32 %v724, %v725
    %v727 = vsel %vm624, %v722, 0.0
    %v728 = vadd.f32 %v726, %v727
    %v729 = vsel %vm630, %v723, 0.0
    %v730 = vadd.f32 %v728, %v729
    %v731 = vrot.slane %v730, 4
    %v732 = vadd.f32 %v730, %v731
    %v733 = vrot.slane %v732, 2
    %v734 = vadd.f32 %v732, %v733
    %v735 = vrot.slane %v734, 1
    %v736 = vadd.f32 %v734, %v735
    %v737 = vld [vmem:[#allocation2 + $0x228] ss:$0 sm:$0xff]
    %v739 = vsel %vm624, %v736, 0
    %741 = vmatprep.subr.mxu0 0.0
    %742 = vmatpush1.msra.mxu0 0.0
    %743 = vmatprep.subr.mxu0 0.0
    %744 = vmatpush1.msra.mxu0 0.0
    %745 = vmatprep.subr.mxu0 0.0
    %746 = vmatpush1.msra.mxu0 0.0
    %747 = vmatprep.subr.mxu0 0.0
    %748 = vmatpush1.msra.mxu0 0.0
    %749 = vmatprep.subr.mxu0 0.0
    %750 = vmatpush1.msra.mxu0 0.0
    %751 = vmatprep.subr.mxu0 0.0
    %752 = vmatpush1.msra.mxu0 0.0
    %753 = vmatprep.subr.mxu0 0.0
    %754 = vmatpush1.msra.mxu0 0.0
    %755 = vmatprep.subr.mxu0 0.0
    %756 = vmatpush1.msra.mxu0 0.0
    %757 = vmatprep.subr.mxu0 0.0
    %758 = vmatpush1.msra.mxu0 0.0
    %759 = vmatprep.subr.mxu0 0.0
    %760 = vmatpush1.msra.mxu0 %v623
    %761 = vmatprep.subr.mxu0 0.0
    %762 = vmatpush1.msra.mxu0 %v622
    %763 = vmatprep.subr.mxu0 0.0
    %764 = vmatpush1.msra.mxu0 %v621
    %765 = vmatprep.subr.mxu0 0.0
    %766 = vmatpush1.msra.mxu0 %v620
    %767 = vmatprep.subr.mxu0 0.0
    %768 = vmatpush1.msra.mxu0 %v619
    %769 = vmatprep.subr.mxu0 0.0
    %770 = vmatpush1.msra.mxu0 %v618
    %771 = vmatprep.subr.mxu0 0.0
    %772 = vmatpush1.msra.mxu0 %v617
    %773 = vmatprep.subr.mxu0 0.0
    %774 = vmatpush2.msra.mxu0 0.0
    %775 = vmatprep.subr.mxu0 0.0
    %776 = vmatpush2.msra.mxu0 0.0
    %777 = vmatprep.subr.mxu0 0.0
    %778 = vmatpush2.msra.mxu0 0.0
    %779 = vmatprep.subr.mxu0 0.0
    %780 = vmatpush2.msra.mxu0 0.0
    %781 = vmatprep.subr.mxu0 0.0
    %782 = vmatpush2.msra.mxu0 0.0
    %783 = vmatprep.subr.mxu0 0.0
    %784 = vmatpush2.msra.mxu0 0.0
    %785 = vmatprep.subr.mxu0 0.0
    %786 = vmatpush2.msra.mxu0 0.0
    %787 = vmatprep.subr.mxu0 0.0
    %788 = vmatpush2.msra.mxu0 0.0
    %789 = vmatprep.subr.mxu0 0.0
    %790 = vmatpush2.msra.mxu0 0.0
    %791 = vmatprep.subr.mxu0 0.0
    %792 = vmatpush2.msra.mxu0 0.0
    %793 = vmatprep.subr.mxu0 0.0
    %794 = vmatpush2.msra.mxu0 0.0
    %795 = vmatprep.subr.mxu0 0.0
    %796 = vmatpush2.msra.mxu0 0.0
    %797 = vmatprep.subr.mxu0 0.0
    %798 = vmatpush2.msra.mxu0 0.0
    %799 = vmatprep.subr.mxu0 0.0
    %800 = vmatpush2.msra.mxu0 0.0
    %801 = vmatprep.subr.mxu0 0.0
    %802 = vmatpush2.msra.mxu0 0.0
    %803 = vmatprep.subr.mxu0 0.0
    %804 = vmatpush2.msra.mxu0 0.0
    %805 = vmatprep.mubr.f32.mxu0 0.0
    %806 = vmatmul.mubr.f32.gmra.mxu0 %v739
    %v807 = vpop.f32.mrf.mxu0
    %v808 = vadd.f32 1e-05, %v807
    %v809 = vpop.f32.mrf.mxu0
    %810 = vdwg.mxu0
    %v811 = vrsqrt.pop %v808
    %v812 = vmul.f32 %v737, %v811
    %v813 = vlaneseq
    %v814 = vshrl.u32 %v813, 7
    %v815 = vsub.s32 0, %v814
    %v816 = vrot.slane %v812, %v815
    %v817 = vmul.f32 %v816, %v716
    %v818 = vmul.f32 %v816, %v717
    %v819 = vmul.f32 %v816, %v718
    %v820 = vmul.f32 %v816, %v719
    %v821 = vld [vmem:[#allocation2 + $0x240] ss:$0 sm:$0xff]
    %v822 = vadd.f32 %v817, %v821
    %v823 = vadd.f32 %v818, %v821
    %v824 = vadd.f32 %v819, %v821
    %v825 = vadd.f32 %v820, %v821
    %v826 = vmax.f32 %v822, 0.0
    %v827 = vmax.f32 %v823, 0.0
    %v828 = vmax.f32 %v824, 0.0
    %v829 = vmax.f32 %v825, 0.0
    %v830 = vld [vmem:[#allocation2 + $0x2e8] sm:$0xff]
    %v831 = vld [vmem:[#allocation2 + $0x2f0] sm:$0xff]
    %v832 = vld [vmem:[#allocation2 + $0x2f8] sm:$0xff]
    %v833 = vld [vmem:[#allocation2 + $0x300] sm:$0xff]
    %v834 = vld [vmem:[#allocation2 + $0x308] sm:$0xff]
    %v835 = vld [vmem:[#allocation2 + $0x310] sm:$0xff]
    %v836 = vld [vmem:[#allocation2 + $0x318] sm:$0xff]
    %v837 = vld [vmem:[#allocation2 + $0x320] sm:$0xff]
    %v838 = vld [vmem:[#allocation2 + $0x328] sm:$0xff]
    %v839 = vld [vmem:[#allocation2 + $0x330] sm:$0xff]
    %v840 = vld [vmem:[#allocation2 + $0x338] sm:$0xff]
    %v841 = vld [vmem:[#allocation2 + $0x340] sm:$0xff]
    %v842 = vld [vmem:[#allocation2 + $0x348] sm:$0xff]
    %v843 = vld [vmem:[#allocation2 + $0x350] sm:$0xff]
    %v844 = vld [vmem:[#allocation2 + $0x358] sm:$0xff]
    %v845 = vld [vmem:[#allocation2 + $0x360] sm:$0xff]
    %v846 = vld [vmem:[#allocation2 + $0x368] sm:$0xff]
    %v847 = vld [vmem:[#allocation2 + $0x370] sm:$0xff]
    %v848 = vld [vmem:[#allocation2 + $0x378] sm:$0xff]
    %v849 = vld [vmem:[#allocation2 + $0x380] sm:$0xff]
    %v850 = vld [vmem:[#allocation2 + $0x388] sm:$0xff]
    %v852 = vsel %vm624, %v826, 0
    %v855 = vsel %vm624, %v827, 0
    %v858 = vsel %vm624, %v828, 0
    %v861 = vsel %vm624, %v829, 0
    %863 = vmatprep.subr.mxu0 0.0
    %864 = vmatpush1.msra.mxu0 0.0
    %865 = vmatprep.subr.mxu0 0.0
    %866 = vmatpush1.msra.mxu0 0.0
    %867 = vmatprep.subr.mxu0 0.0
    %868 = vmatpush1.msra.mxu0 0.0
    %869 = vmatprep.subr.mxu0 0.0
    %870 = vmatpush1.msra.mxu0 0.0
    %871 = vmatprep.subr.mxu0 0.0
    %872 = vmatpush1.msra.mxu0 0.0
    %873 = vmatprep.subr.mxu0 0.0
    %874 = vmatpush1.msra.mxu0 0.0
    %875 = vmatprep.subr.mxu0 0.0
    %876 = vmatpush1.msra.mxu0 0.0
    %877 = vmatprep.subr.mxu0 0.0
    %878 = vmatpush1.msra.mxu0 0.0
    %879 = vmatprep.subr.mxu0 0.0
    %880 = vmatpush1.msra.mxu0 0.0
    %881 = vmatprep.subr.mxu0 %v849
    %882 = vmatpush1.msra.mxu0 %v848
    %883 = vmatprep.subr.mxu0 %v846
    %884 = vmatpush1.msra.mxu0 %v845
    %885 = vmatprep.subr.mxu0 %v843
    %886 = vmatpush1.msra.mxu0 %v842
    %887 = vmatprep.subr.mxu0 %v840
    %888 = vmatpush1.msra.mxu0 %v839
    %889 = vmatprep.subr.mxu0 %v837
    %890 = vmatpush1.msra.mxu0 %v836
    %891 = vmatprep.subr.mxu0 %v834
    %892 = vmatpush1.msra.mxu0 %v833
    %893 = vmatprep.subr.mxu0 %v831
    %894 = vmatpush1.msra.mxu0 %v830
    %895 = vmatprep.subr.mxu0 0.0
    %896 = vmatpush2.msra.mxu0 0.0
    %897 = vmatprep.subr.mxu0 0.0
    %898 = vmatpush2.msra.mxu0 0.0
    %899 = vmatprep.subr.mxu0 0.0
    %900 = vmatpush2.msra.mxu0 0.0
    %901 = vmatprep.subr.mxu0 0.0
    %902 = vmatpush2.msra.mxu0 0.0
    %903 = vmatprep.subr.mxu0 0.0
    %904 = vmatpush2.msra.mxu0 0.0
    %905 = vmatprep.subr.mxu0 0.0
    %906 = vmatpush2.msra.mxu0 0.0
    %907 = vmatprep.subr.mxu0 0.0
    %908 = vmatpush2.msra.mxu0 0.0
    %909 = vmatprep.subr.mxu0 0.0
    %910 = vmatpush2.msra.mxu0 0.0
    %911 = vmatprep.subr.mxu0 0.0
    %912 = vmatpush2.msra.mxu0 0.0
    %913 = vmatprep.subr.mxu0 0.0
    %914 = vmatpush2.msra.mxu0 0.0
    %915 = vmatprep.subr.mxu0 0.0
    %916 = vmatpush2.msra.mxu0 0.0
    %917 = vmatprep.subr.mxu0 0.0
    %918 = vmatpush2.msra.mxu0 0.0
    %919 = vmatprep.subr.mxu0 0.0
    %920 = vmatpush2.msra.mxu0 0.0
    %921 = vmatprep.subr.mxu0 0.0
    %922 = vmatpush2.msra.mxu0 0.0
    %923 = vmatprep.subr.mxu0 0.0
    %924 = vmatpush2.msra.mxu0 0.0
    %925 = vmatprep.subr.mxu0 0.0
    %926 = vmatpush2.msra.mxu0 0.0
    %927 = vmatprep.mubr.f32.mxu0 0.0
    %928 = vmatmul.mubr.f32.gmra.mxu0 %v852
    %v929 = vpop.f32.mrf.mxu0
    %v930 = vadd.f32 0.0, %v929
    %v931 = vpop.f32.mrf.mxu0
    %v932 = vadd.f32 0.0, %v931
    %933 = vmatprep.mubr.f32.mxu0 0.0
    %934 = vmatmul.mubr.f32.gmra.mxu0 %v855
    %v935 = vpop.f32.mrf.mxu0
    %v936 = vadd.f32 0.0, %v935
    %v937 = vpop.f32.mrf.mxu0
    %v938 = vadd.f32 0.0, %v937
    %939 = vmatprep.mubr.f32.mxu0 0.0
    %940 = vmatmul.mubr.f32.gmra.mxu0 %v858
    %v941 = vpop.f32.mrf.mxu0
    %v942 = vadd.f32 0.0, %v941
    %v943 = vpop.f32.mrf.mxu0
    %v944 = vadd.f32 0.0, %v943
    %945 = vmatprep.mubr.f32.mxu0 0.0
    %946 = vmatmul.mubr.f32.gmra.mxu0 %v861
    %v947 = vpop.f32.mrf.mxu0
    %v948 = vadd.f32 0.0, %v947
    %v949 = vpop.f32.mrf.mxu0
    %v950 = vadd.f32 0.0, %v949
    %951 = vdwg.mxu0
    %952 = vmatprep.subr.mxu0 0.0
    %953 = vmatpush1.msra.mxu0 0.0
    %954 = vmatprep.subr.mxu0 0.0
    %955 = vmatpush1.msra.mxu0 0.0
    %956 = vmatprep.subr.mxu0 0.0
    %957 = vmatpush1.msra.mxu0 0.0
    %958 = vmatprep.subr.mxu0 0.0
    %959 = vmatpush1.msra.mxu0 0.0
    %960 = vmatprep.subr.mxu0 0.0
    %961 = vmatpush1.msra.mxu0 0.0
    %962 = vmatprep.subr.mxu0 0.0
    %963 = vmatpush1.msra.mxu0 0.0
    %964 = vmatprep.subr.mxu0 0.0
    %965 = vmatpush1.msra.mxu0 0.0
    %966 = vmatprep.subr.mxu0 0.0
    %967 = vmatpush1.msra.mxu0 0.0
    %968 = vmatprep.subr.mxu0 0.0
    %969 = vmatpush1.msra.mxu0 0.0
    %970 = vmatprep.subr.mxu0 0.0
    %971 = vmatpush1.msra.mxu0 %v850
    %972 = vmatprep.subr.mxu0 0.0
    %973 = vmatpush1.msra.mxu0 %v847
    %974 = vmatprep.subr.mxu0 0.0
    %975 = vmatpush1.msra.mxu0 %v844
    %976 = vmatprep.subr.mxu0 0.0
    %977 = vmatpush1.msra.mxu0 %v841
    %978 = vmatprep.subr.mxu0 0.0
    %979 = vmatpush1.msra.mxu0 %v838
    %980 = vmatprep.subr.mxu0 0.0
    %981 = vmatpush1.msra.mxu0 %v835
    %982 = vmatprep.subr.mxu0 0.0
    %983 = vmatpush1.msra.mxu0 %v832
    %984 = vmatprep.subr.mxu0 0.0
    %985 = vmatpush2.msra.mxu0 0.0
    %986 = vmatprep.subr.mxu0 0.0
    %987 = vmatpush2.msra.mxu0 0.0
    %988 = vmatprep.subr.mxu0 0.0
    %989 = vmatpush2.msra.mxu0 0.0
    %990 = vmatprep.subr.mxu0 0.0
    %991 = vmatpush2.msra.mxu0 0.0
    %992 = vmatprep.subr.mxu0 0.0
    %993 = vmatpush2.msra.mxu0 0.0
    %994 = vmatprep.subr.mxu0 0.0
    %995 = vmatpush2.msra.mxu0 0.0
    %996 = vmatprep.subr.mxu0 0.0
    %997 = vmatpush2.msra.mxu0 0.0
    %998 = vmatprep.subr.mxu0 0.0
    %999 = vmatpush2.msra.mxu0 0.0
    %1000 = vmatprep.subr.mxu0 0.0
    %1001 = vmatpush2.msra.mxu0 0.0
    %1002 = vmatprep.subr.mxu0 0.0
    %1003 = vmatpush2.msra.mxu0 0.0
    %1004 = vmatprep.subr.mxu0 0.0
    %1005 = vmatpush2.msra.mxu0 0.0
    %1006 = vmatprep.subr.mxu0 0.0
    %1007 = vmatpush2.msra.mxu0 0.0
    %1008 = vmatprep.subr.mxu0 0.0
    %1009 = vmatpush2.msra.mxu0 0.0
    %1010 = vmatprep.subr.mxu0 0.0
    %1011 = vmatpush2.msra.mxu0 0.0
    %1012 = vmatprep.subr.mxu0 0.0
    %1013 = vmatpush2.msra.mxu0 0.0
    %1014 = vmatprep.subr.mxu0 0.0
    %1015 = vmatpush2.msra.mxu0 0.0
    %1016 = vmatprep.mubr.f32.mxu0 0.0
    %1017 = vmatmul.mubr.f32.gmra.mxu0 %v852
    %v1018 = vpop.f32.mrf.mxu0
    %v1019 = vadd.f32 0.0, %v1018
    %v1020 = vpop.f32.mrf.mxu0
    %1021 = vmatprep.mubr.f32.mxu0 0.0
    %1022 = vmatmul.mubr.f32.gmra.mxu0 %v855
    %v1023 = vpop.f32.mrf.mxu0
    %v1024 = vadd.f32 0.0, %v1023
    %v1025 = vpop.f32.mrf.mxu0
    %1026 = vmatprep.mubr.f32.mxu0 0.0
    %1027 = vmatmul.mubr.f32.gmra.mxu0 %v858
    %v1028 = vpop.f32.mrf.mxu0
    %v1029 = vadd.f32 0.0, %v1028
    %v1030 = vpop.f32.mrf.mxu0
    %1031 = vmatprep.mubr.f32.mxu0 0.0
    %1032 = vmatmul.mubr.f32.gmra.mxu0 %v861
    %v1033 = vpop.f32.mrf.mxu0
    %v1034 = vadd.f32 0.0, %v1033
    %v1035 = vpop.f32.mrf.mxu0
    %1036 = vdwg.mxu0
    %v1037 = vld [vmem:[#allocation2 + $0x258] sm:$0xff]
    %v1038 = vld [vmem:[#allocation2 + $0x270] sm:$0xf]
    %v1039 = vld [vmem:[#allocation2 + $0x288] sm:$0xff]
    %v1040 = vld [vmem:[#allocation2 + $0x2a0] sm:$0xf]
    %vm1041 = vcmask 228352
    %v1043 = vsel %vm1041, %v1039, 0
    %v1046 = vsel %vm1041, %v1040, 0
    %vm1048 = vcmask 1043456
    %v1050 = vsel %vm1048, %v950, 0
    %1052 = vmatprep.subr.mxu0 0.0
    %1053 = vmatpush1.msra.mxu0 0.0
    %1054 = vmatprep.subr.mxu0 0.0
    %1055 = vmatpush1.msra.mxu0 0.0
    %1056 = vmatprep.subr.mxu0 0.0
    %1057 = vmatpush1.msra.mxu0 0.0
    %1058 = vmatprep.subr.mxu0 0.0
    %1059 = vmatpush1.msra.mxu0 0.0
    %1060 = vmatprep.subr.mxu0 0.0
    %1061 = vmatpush1.msra.mxu0 0.0
    %1062 = vmatprep.subr.mxu0 0.0
    %1063 = vmatpush1.msra.mxu0 0.0
    %1064 = vmatprep.subr.mxu0 0.0
    %1065 = vmatpush1.msra.mxu0 0.0
    %1066 = vmatprep.subr.mxu0 0.0
    %1067 = vmatpush1.msra.mxu0 0.0
    %1068 = vmatprep.subr.mxu0 0.0
    %1069 = vmatpush1.msra.mxu0 0.0
    %1070 = vmatprep.subr.mxu0 0.0
    %1071 = vmatpush1.msra.mxu0 0.0
    %1072 = vmatprep.subr.mxu0 0.0
    %1073 = vmatpush1.msra.mxu0 0.0
    %1074 = vmatprep.subr.mxu0 0.0
    %1075 = vmatpush1.msra.mxu0 0.0
    %1076 = vmatprep.subr.mxu0 0.0
    %1077 = vmatpush1.msra.mxu0 %v1050
    %1078 = vmatprep.subr.mxu0 0.0
    %1079 = vmatpush1.msra.mxu0 %v944
    %1080 = vmatprep.subr.mxu0 0.0
    %1081 = vmatpush1.msra.mxu0 %v938
    %1082 = vmatprep.subr.mxu0 0.0
    %1083 = vmatpush1.msra.mxu0 %v932
    %1084 = vmatprep.subr.mxu0 0.0
    %1085 = vmatpush2.msra.mxu0 0.0
    %1086 = vmatprep.subr.mxu0 0.0
    %1087 = vmatpush2.msra.mxu0 0.0
    %1088 = vmatprep.subr.mxu0 0.0
    %1089 = vmatpush2.msra.mxu0 0.0
    %1090 = vmatprep.subr.mxu0 0.0
    %1091 = vmatpush2.msra.mxu0 0.0
    %1092 = vmatprep.subr.mxu0 0.0
    %1093 = vmatpush2.msra.mxu0 0.0
    %1094 = vmatprep.subr.mxu0 0.0
    %1095 = vmatpush2.msra.mxu0 0.0
    %1096 = vmatprep.subr.mxu0 0.0
    %1097 = vmatpush2.msra.mxu0 0.0
    %1098 = vmatprep.subr.mxu0 0.0
    %1099 = vmatpush2.msra.mxu0 0.0
    %1100 = vmatprep.subr.mxu0 0.0
    %1101 = vmatpush2.msra.mxu0 0.0
    %1102 = vmatprep.subr.mxu0 0.0
    %1103 = vmatpush2.msra.mxu0 0.0
    %1104 = vmatprep.subr.mxu0 0.0
    %1105 = vmatpush2.msra.mxu0 0.0
    %1106 = vmatprep.subr.mxu0 0.0
    %1107 = vmatpush2.msra.mxu0 0.0
    %1108 = vmatprep.subr.mxu0 0.0
    %1109 = vmatpush2.msra.mxu0 0.0
    %1110 = vmatprep.subr.mxu0 0.0
    %1111 = vmatpush2.msra.mxu0 0.0
    %1112 = vmatprep.subr.mxu0 0.0
    %1113 = vmatpush2.msra.mxu0 0.0
    %1114 = vmatprep.subr.mxu0 0.0
    %1115 = vmatpush2.msra.mxu0 0.0
    %1116 = vmatprep.mubr.f32.mxu0 0.0
    %1117 = vmatmul.mubr.f32.gmra.mxu0 %v1043
    %v1118 = vpop.f32.mrf.mxu0
    %v1119 = vadd.f32 0.0, %v1118
    %v1120 = vpop.f32.mrf.mxu0
    %1121 = vmatprep.mubr.f32.mxu0 0.0
    %1122 = vmatmul.mubr.f32.gmra.mxu0 %v1046
    %v1123 = vpop.f32.mrf.mxu0
    %v1124 = vadd.f32 0.0, %v1123
    %v1125 = vpop.f32.mrf.mxu0
    %1126 = vdwg.mxu0
    %v1128 = vsel %vm1041, %v1037, 0
    %v1131 = vsel %vm1041, %v1038, 0
    %v1134 = vsel %vm1048, %v948, 0
    %1136 = vmatprep.subr.mxu0 0.0
    %1137 = vmatpush1.msra.mxu0 0.0
    %1138 = vmatprep.subr.mxu0 0.0
    %1139 = vmatpush1.msra.mxu0 0.0
    %1140 = vmatprep.subr.mxu0 0.0
    %1141 = vmatpush1.msra.mxu0 0.0
    %1142 = vmatprep.subr.mxu0 0.0
    %1143 = vmatpush1.msra.mxu0 0.0
    %1144 = vmatprep.subr.mxu0 0.0
    %1145 = vmatpush1.msra.mxu0 0.0
    %1146 = vmatprep.subr.mxu0 0.0
    %1147 = vmatpush1.msra.mxu0 0.0
    %1148 = vmatprep.subr.mxu0 0.0
    %1149 = vmatpush1.msra.mxu0 0.0
    %1150 = vmatprep.subr.mxu0 0.0
    %1151 = vmatpush1.msra.mxu0 0.0
    %1152 = vmatprep.subr.mxu0 0.0
    %1153 = vmatpush1.msra.mxu0 0.0
    %1154 = vmatprep.subr.mxu0 0.0
    %1155 = vmatpush1.msra.mxu0 0.0
    %1156 = vmatprep.subr.mxu0 0.0
    %1157 = vmatpush1.msra.mxu0 0.0
    %1158 = vmatprep.subr.mxu0 0.0
    %1159 = vmatpush1.msra.mxu0 0.0
    %1160 = vmatprep.subr.mxu0 0.0
    %1161 = vmatpush1.msra.mxu0 %v1134
    %1162 = vmatprep.subr.mxu0 0.0
    %1163 = vmatpush1.msra.mxu0 %v942
    %1164 = vmatprep.subr.mxu0 0.0
    %1165 = vmatpush1.msra.mxu0 %v936
    %1166 = vmatprep.subr.mxu0 0.0
    %1167 = vmatpush1.msra.mxu0 %v930
    %1168 = vmatprep.subr.mxu0 0.0
    %1169 = vmatpush2.msra.mxu0 0.0
    %1170 = vmatprep.subr.mxu0 0.0
    %1171 = vmatpush2.msra.mxu0 0.0
    %1172 = vmatprep.subr.mxu0 0.0
    %1173 = vmatpush2.msra.mxu0 0.0
    %1174 = vmatprep.subr.mxu0 0.0
    %1175 = vmatpush2.msra.mxu0 0.0
    %1176 = vmatprep.subr.mxu0 0.0
    %1177 = vmatpush2.msra.mxu0 0.0
    %1178 = vmatprep.subr.mxu0 0.0
    %1179 = vmatpush2.msra.mxu0 0.0
    %1180 = vmatprep.subr.mxu0 0.0
    %1181 = vmatpush2.msra.mxu0 0.0
    %1182 = vmatprep.subr.mxu0 0.0
    %1183 = vmatpush2.msra.mxu0 0.0
    %1184 = vmatprep.subr.mxu0 0.0
    %1185 = vmatpush2.msra.mxu0 0.0
    %1186 = vmatprep.subr.mxu0 0.0
    %1187 = vmatpush2.msra.mxu0 0.0
    %1188 = vmatprep.subr.mxu0 0.0
    %1189 = vmatpush2.msra.mxu0 0.0
    %1190 = vmatprep.subr.mxu0 0.0
    %1191 = vmatpush2.msra.mxu0 0.0
    %1192 = vmatprep.subr.mxu0 0.0
    %1193 = vmatpush2.msra.mxu0 0.0
    %1194 = vmatprep.subr.mxu0 0.0
    %1195 = vmatpush2.msra.mxu0 0.0
    %1196 = vmatprep.subr.mxu0 0.0
    %1197 = vmatpush2.msra.mxu0 0.0
    %1198 = vmatprep.subr.mxu0 0.0
    %1199 = vmatpush2.msra.mxu0 0.0
    %1200 = vmatprep.mubr.f32.mxu0 0.0
    %1201 = vmatmul.mubr.f32.gmra.mxu0 %v1128
    %v1202 = vpop.f32.mrf.mxu0
    %v1203 = vadd.f32 %v1119, %v1202
    %v1204 = vpop.f32.mrf.mxu0
    %1205 = vmatprep.mubr.f32.mxu0 0.0
    %1206 = vmatmul.mubr.f32.gmra.mxu0 %v1131
    %v1207 = vpop.f32.mrf.mxu0
    %v1208 = vadd.f32 %v1124, %v1207
    %v1209 = vpop.f32.mrf.mxu0
    %1210 = vdwg.mxu0
    %v1211 = vld [vmem:[#allocation2 + $0x2b8] sm:$0xff]
    %v1212 = vld [vmem:[#allocation2 + $0x2d0] sm:$0xf]
    %v1214 = vsel %vm1041, %v1211, 0
    %v1217 = vsel %vm1041, %v1212, 0
    %v1220 = vsel %vm1048, %v1034, 0
    %1222 = vmatprep.subr.mxu0 0.0
    %1223 = vmatpush1.msra.mxu0 0.0
    %1224 = vmatprep.subr.mxu0 0.0
    %1225 = vmatpush1.msra.mxu0 0.0
    %1226 = vmatprep.subr.mxu0 0.0
    %1227 = vmatpush1.msra.mxu0 0.0
    %1228 = vmatprep.subr.mxu0 0.0
    %1229 = vmatpush1.msra.mxu0 0.0
    %1230 = vmatprep.subr.mxu0 0.0
    %1231 = vmatpush1.msra.mxu0 0.0
    %1232 = vmatprep.subr.mxu0 0.0
    %1233 = vmatpush1.msra.mxu0 0.0
    %1234 = vmatprep.subr.mxu0 0.0
    %1235 = vmatpush1.msra.mxu0 0.0
    %1236 = vmatprep.subr.mxu0 0.0
    %1237 = vmatpush1.msra.mxu0 0.0
    %1238 = vmatprep.subr.mxu0 0.0
    %1239 = vmatpush1.msra.mxu0 0.0
    %1240 = vmatprep.subr.mxu0 0.0
    %1241 = vmatpush1.msra.mxu0 0.0
    %1242 = vmatprep.subr.mxu0 0.0
    %1243 = vmatpush1.msra.mxu0 0.0
    %1244 = vmatprep.subr.mxu0 0.0
    %1245 = vmatpush1.msra.mxu0 0.0
    %1246 = vmatprep.subr.mxu0 0.0
    %1247 = vmatpush1.msra.mxu0 %v1220
    %1248 = vmatprep.subr.mxu0 0.0
    %1249 = vmatpush1.msra.mxu0 %v1029
    %1250 = vmatprep.subr.mxu0 0.0
    %1251 = vmatpush1.msra.mxu0 %v1024
    %1252 = vmatprep.subr.mxu0 0.0
    %1253 = vmatpush1.msra.mxu0 %v1019
    %1254 = vmatprep.subr.mxu0 0.0
    %1255 = vmatpush2.msra.mxu0 0.0
    %1256 = vmatprep.subr.mxu0 0.0
    %1257 = vmatpush2.msra.mxu0 0.0
    %1258 = vmatprep.subr.mxu0 0.0
    %1259 = vmatpush2.msra.mxu0 0.0
    %1260 = vmatprep.subr.mxu0 0.0
    %1261 = vmatpush2.msra.mxu0 0.0
    %1262 = vmatprep.subr.mxu0 0.0
    %1263 = vmatpush2.msra.mxu0 0.0
    %1264 = vmatprep.subr.mxu0 0.0
    %1265 = vmatpush2.msra.mxu0 0.0
    %1266 = vmatprep.subr.mxu0 0.0
    %1267 = vmatpush2.msra.mxu0 0.0
    %1268 = vmatprep.subr.mxu0 0.0
    %1269 = vmatpush2.msra.mxu0 0.0
    %1270 = vmatprep.subr.mxu0 0.0
    %1271 = vmatpush2.msra.mxu0 0.0
    %1272 = vmatprep.subr.mxu0 0.0
    %1273 = vmatpush2.msra.mxu0 0.0
    %1274 = vmatprep.subr.mxu0 0.0
    %1275 = vmatpush2.msra.mxu0 0.0
    %1276 = vmatprep.subr.mxu0 0.0
    %1277 = vmatpush2.msra.mxu0 0.0
    %1278 = vmatprep.subr.mxu0 0.0
    %1279 = vmatpush2.msra.mxu0 0.0
    %1280 = vmatprep.subr.mxu0 0.0
    %1281 = vmatpush2.msra.mxu0 0.0
    %1282 = vmatprep.subr.mxu0 0.0
    %1283 = vmatpush2.msra.mxu0 0.0
    %1284 = vmatprep.subr.mxu0 0.0
    %1285 = vmatpush2.msra.mxu0 0.0
    %1286 = vmatprep.mubr.f32.mxu0 0.0
    %1287 = vmatmul.mubr.f32.gmra.mxu0 %v1214
    %v1288 = vpop.f32.mrf.mxu0
    %v1289 = vadd.f32 0.0, %v1288
    %v1290 = vpop.f32.mrf.mxu0
    %1291 = vmatprep.mubr.f32.mxu0 0.0
    %1292 = vmatmul.mubr.f32.gmra.mxu0 %v1217
    %v1293 = vpop.f32.mrf.mxu0
    %v1294 = vadd.f32 0.0, %v1293
    %v1295 = vpop.f32.mrf.mxu0
    %1296 = vdwg.mxu0
    %v1297 = vadd.f32 %v1203, %v1289
    %v1298 = vadd.f32 %v1208, %v1294
    %v1299 = vld [vmem:[#allocation2 + $0x390] sm:$0xff]
    %v1300 = vld [vmem:[#allocation2 + $0x3a8] sm:$0xff]
    %v1301 = vld [vmem:[#allocation2 + $0x3c0] sm:$0xff]
    %v1302 = vld [vmem:[#allocation2 + $0x3d8] sm:$0xff]
    %v1303 = vld [vmem:[#allocation2 + $0x3f0] sm:$0xff]
    %v1304 = vld [vmem:[#allocation2 + $0x408] sm:$0xff]
    %vm1305 = vcmask 392192
    %v1306 = vsel %vm1305, %v1297, 0.0
    %vm1307 = vcmask 388096
    %v1308 = vsel %vm1307, %v1298, 0.0
    %v1309 = vadd.f32 %v1306, %v1308
    %v1310 = vrot.slane %v1309, 4
    %v1311 = vadd.f32 %v1309, %v1310
    %v1312 = vrot.slane %v1311, 2
    %v1313 = vadd.f32 %v1311, %v1312
    %v1314 = vrot.slane %v1313, 1
    %v1315 = vadd.f32 %v1313, %v1314
    %v1317 = vsel %vm1305, %v1315, 0
    %1319 = vmatprep.subr.mxu0 0.0
    %1320 = vmatpush1.msra.mxu0 0.0
    %1321 = vmatprep.subr.mxu0 0.0
    %1322 = vmatpush1.msra.mxu0 0.0
    %1323 = vmatprep.subr.mxu0 0.0
    %1324 = vmatpush1.msra.mxu0 0.0
    %1325 = vmatprep.subr.mxu0 0.0
    %1326 = vmatpush1.msra.mxu0 0.0
    %1327 = vmatprep.subr.mxu0 0.0
    %1328 = vmatpush1.msra.mxu0 0.0
    %1329 = vmatprep.subr.mxu0 0.0
    %1330 = vmatpush1.msra.mxu0 0.0
    %1331 = vmatprep.subr.mxu0 0.0
    %1332 = vmatpush1.msra.mxu0 0.0
    %1333 = vmatprep.subr.mxu0 0.0
    %1334 = vmatpush1.msra.mxu0 0.0
    %1335 = vmatprep.subr.mxu0 0.0
    %1336 = vmatpush1.msra.mxu0 0.0
    %1337 = vmatprep.subr.mxu0 0.0
    %1338 = vmatpush1.msra.mxu0 0.0
    %1339 = vmatprep.subr.mxu0 0.0
    %1340 = vmatpush1.msra.mxu0 %v1304
    %1341 = vmatprep.subr.mxu0 0.0
    %1342 = vmatpush1.msra.mxu0 %v1303
    %1343 = vmatprep.subr.mxu0 0.0
    %1344 = vmatpush1.msra.mxu0 %v1302
    %1345 = vmatprep.subr.mxu0 0.0
    %1346 = vmatpush1.msra.mxu0 %v1301
    %1347 = vmatprep.subr.mxu0 0.0
    %1348 = vmatpush1.msra.mxu0 %v1300
    %1349 = vmatprep.subr.mxu0 0.0
    %1350 = vmatpush1.msra.mxu0 %v1299
    %1351 = vmatprep.subr.mxu0 0.0
    %1352 = vmatpush2.msra.mxu0 0.0
    %1353 = vmatprep.subr.mxu0 0.0
    %1354 = vmatpush2.msra.mxu0 0.0
    %1355 = vmatprep.subr.mxu0 0.0
    %1356 = vmatpush2.msra.mxu0 0.0
    %1357 = vmatprep.subr.mxu0 0.0
    %1358 = vmatpush2.msra.mxu0 0.0
    %1359 = vmatprep.subr.mxu0 0.0
    %1360 = vmatpush2.msra.mxu0 0.0
    %1361 = vmatprep.subr.mxu0 0.0
    %1362 = vmatpush2.msra.mxu0 0.0
    %1363 = vmatprep.subr.mxu0 0.0
    %1364 = vmatpush2.msra.mxu0 0.0
    %1365 = vmatprep.subr.mxu0 0.0
    %1366 = vmatpush2.msra.mxu0 0.0
    %1367 = vmatprep.subr.mxu0 0.0
    %1368 = vmatpush2.msra.mxu0 0.0
    %1369 = vmatprep.subr.mxu0 0.0
    %1370 = vmatpush2.msra.mxu0 0.0
    %1371 = vmatprep.subr.mxu0 0.0
    %1372 = vmatpush2.msra.mxu0 0.0
    %1373 = vmatprep.subr.mxu0 0.0
    %1374 = vmatpush2.msra.mxu0 0.0
    %1375 = vmatprep.subr.mxu0 0.0
    %1376 = vmatpush2.msra.mxu0 0.0
    %1377 = vmatprep.subr.mxu0 0.0
    %1378 = vmatpush2.msra.mxu0 0.0
    %1379 = vmatprep.subr.mxu0 0.0
    %1380 = vmatpush2.msra.mxu0 0.0
    %1381 = vmatprep.subr.mxu0 0.0
    %1382 = vmatpush2.msra.mxu0 0.0
    %1383 = vmatprep.mubr.f32.mxu0 0.0
    %1384 = vmatmul.mubr.f32.gmra.mxu0 %v1317
    %v1385 = vpop.f32.mrf.mxu0
    %v1386 = vadd.f32 0.0, %v1385
    %v1387 = vpop.f32.mrf.mxu0
    %1388 = vdwg.mxu0
    %v1389 = vlaneseq
    %v1390 = vshrl.u32 %v1389, 7
    %v1391 = vsub.s32 0, %v1390
    %v1392 = vrot.slane %v1386, %v1391
    %v1393 = vsub.f32 %v1297, %v1392
    %v1394 = vsub.f32 %v1298, %v1392
    %v1395 = vmul.f32 %v1393, %v1393
    %v1396 = vmul.f32 %v1394, %v1394
    %v1397 = vsel %vm1305, %v1395, 0.0
    %v1398 = vsel %vm1307, %v1396, 0.0
    %v1399 = vadd.f32 %v1397, %v1398
    %v1400 = vrot.slane %v1399, 4
    %v1401 = vadd.f32 %v1399, %v1400
    %v1402 = vrot.slane %v1401, 2
    %v1403 = vadd.f32 %v1401, %v1402
    %v1404 = vrot.slane %v1403, 1
    %v1405 = vadd.f32 %v1403, %v1404
    %v1406 = vld [vmem:[#allocation2 + $0x420] ss:$0 sm:$0xff]
    %v1408 = vsel %vm1305, %v1405, 0
    %1410 = vmatprep.subr.mxu0 0.0
    %1411 = vmatpush1.msra.mxu0 0.0
    %1412 = vmatprep.subr.mxu0 0.0
    %1413 = vmatpush1.msra.mxu0 0.0
    %1414 = vmatprep.subr.mxu0 0.0
    %1415 = vmatpush1.msra.mxu0 0.0
    %1416 = vmatprep.subr.mxu0 0.0
    %1417 = vmatpush1.msra.mxu0 0.0
    %1418 = vmatprep.subr.mxu0 0.0
    %1419 = vmatpush1.msra.mxu0 0.0
    %1420 = vmatprep.subr.mxu0 0.0
    %1421 = vmatpush1.msra.mxu0 0.0
    %1422 = vmatprep.subr.mxu0 0.0
    %1423 = vmatpush1.msra.mxu0 0.0
    %1424 = vmatprep.subr.mxu0 0.0
    %1425 = vmatpush1.msra.mxu0 0.0
    %1426 = vmatprep.subr.mxu0 0.0
    %1427 = vmatpush1.msra.mxu0 0.0
    %1428 = vmatprep.subr.mxu0 0.0
    %1429 = vmatpush1.msra.mxu0 0.0
    %1430 = vmatprep.subr.mxu0 0.0
    %1431 = vmatpush1.msra.mxu0 %v1304
    %1432 = vmatprep.subr.mxu0 0.0
    %1433 = vmatpush1.msra.mxu0 %v1303
    %1434 = vmatprep.subr.mxu0 0.0
    %1435 = vmatpush1.msra.mxu0 %v1302
    %1436 = vmatprep.subr.mxu0 0.0
    %1437 = vmatpush1.msra.mxu0 %v1301
    %1438 = vmatprep.subr.mxu0 0.0
    %1439 = vmatpush1.msra.mxu0 %v1300
    %1440 = vmatprep.subr.mxu0 0.0
    %1441 = vmatpush1.msra.mxu0 %v1299
    %1442 = vmatprep.subr.mxu0 0.0
    %1443 = vmatpush2.msra.mxu0 0.0
    %1444 = vmatprep.subr.mxu0 0.0
    %1445 = vmatpush2.msra.mxu0 0.0
    %1446 = vmatprep.subr.mxu0 0.0
    %1447 = vmatpush2.msra.mxu0 0.0
    %1448 = vmatprep.subr.mxu0 0.0
    %1449 = vmatpush2.msra.mxu0 0.0
    %1450 = vmatprep.subr.mxu0 0.0
    %1451 = vmatpush2.msra.mxu0 0.0
    %1452 = vmatprep.subr.mxu0 0.0
    %1453 = vmatpush2.msra.mxu0 0.0
    %1454 = vmatprep.subr.mxu0 0.0
    %1455 = vmatpush2.msra.mxu0 0.0
    %1456 = vmatprep.subr.mxu0 0.0
    %1457 = vmatpush2.msra.mxu0 0.0
    %1458 = vmatprep.subr.mxu0 0.0
    %1459 = vmatpush2.msra.mxu0 0.0
    %1460 = vmatprep.subr.mxu0 0.0
    %1461 = vmatpush2.msra.mxu0 0.0
    %1462 = vmatprep.subr.mxu0 0.0
    %1463 = vmatpush2.msra.mxu0 0.0
    %1464 = vmatprep.subr.mxu0 0.0
    %1465 = vmatpush2.msra.mxu0 0.0
    %1466 = vmatprep.subr.mxu0 0.0
    %1467 = vmatpush2.msra.mxu0 0.0
    %1468 = vmatprep.subr.mxu0 0.0
    %1469 = vmatpush2.msra.mxu0 0.0
    %1470 = vmatprep.subr.mxu0 0.0
    %1471 = vmatpush2.msra.mxu0 0.0
    %1472 = vmatprep.subr.mxu0 0.0
    %1473 = vmatpush2.msra.mxu0 0.0
    %1474 = vmatprep.mubr.f32.mxu0 0.0
    %1475 = vmatmul.mubr.f32.gmra.mxu0 %v1408
    %v1476 = vpop.f32.mrf.mxu0
    %v1477 = vadd.f32 1e-05, %v1476
    %v1478 = vpop.f32.mrf.mxu0
    %1479 = vdwg.mxu0
    %v1480 = vrsqrt.pop %v1477
    %v1481 = vmul.f32 %v1406, %v1480
    %v1482 = vlaneseq
    %v1483 = vshrl.u32 %v1482, 7
    %v1484 = vsub.s32 0, %v1483
    %v1485 = vrot.slane %v1481, %v1484
    %v1486 = vmul.f32 %v1485, %v1393
    %v1487 = vmul.f32 %v1485, %v1394
    %v1488 = vld [vmem:[#allocation2 + $0x438] ss:$0 sm:$0xff]
    %v1489 = vadd.f32 %v1486, %v1488
    %v1490 = vadd.f32 %v1487, %v1488
    %v1491 = vmax.f32 %v1489, 0.0
    %v1492 = vmax.f32 %v1490, 0.0
    %v1493 = vld [vmem:[#allocation2 + $0x498] sm:$0xff]
    %v1494 = vld [vmem:[#allocation2 + $0x4a0] sm:$0xff]
    %v1495 = vld [vmem:[#allocation2 + $0x4a8] sm:$0xff]
    %v1496 = vld [vmem:[#allocation2 + $0x4b0] sm:$0xff]
    %v1497 = vld [vmem:[#allocation2 + $0x4b8] sm:$0xff]
    %v1498 = vld [vmem:[#allocation2 + $0x4c0] sm:$0xff]
    %v1499 = vld [vmem:[#allocation2 + $0x4c8] sm:$0xff]
    %v1500 = vld [vmem:[#allocation2 + $0x4d0] sm:$0xff]
    %v1501 = vld [vmem:[#allocation2 + $0x4d8] sm:$0xff]
    %v1502 = vld [vmem:[#allocation2 + $0x4e0] sm:$0xff]
    %v1503 = vld [vmem:[#allocation2 + $0x4e8] sm:$0xff]
    %v1504 = vld [vmem:[#allocation2 + $0x4f0] sm:$0xff]
    %v1505 = vld [vmem:[#allocation2 + $0x4f8] sm:$0xff]
    %v1506 = vld [vmem:[#allocation2 + $0x500] sm:$0xff]
    %v1507 = vld [vmem:[#allocation2 + $0x508] sm:$0xff]
    %v1508 = vld [vmem:[#allocation2 + $0x510] sm:$0xff]
    %v1509 = vld [vmem:[#allocation2 + $0x518] sm:$0xff]
    %v1510 = vld [vmem:[#allocation2 + $0x520] sm:$0xff]
    %v1512 = vsel %vm1305, %v1491, 0
    %v1515 = vsel %vm1305, %v1492, 0
    %1517 = vmatprep.subr.mxu0 0.0
    %1518 = vmatpush1.msra.mxu0 0.0
    %1519 = vmatprep.subr.mxu0 0.0
    %1520 = vmatpush1.msra.mxu0 0.0
    %1521 = vmatprep.subr.mxu0 0.0
    %1522 = vmatpush1.msra.mxu0 0.0
    %1523 = vmatprep.subr.mxu0 0.0
    %1524 = vmatpush1.msra.mxu0 0.0
    %1525 = vmatprep.subr.mxu0 0.0
    %1526 = vmatpush1.msra.mxu0 0.0
    %1527 = vmatprep.subr.mxu0 0.0
    %1528 = vmatpush1.msra.mxu0 0.0
    %1529 = vmatprep.subr.mxu0 0.0
    %1530 = vmatpush1.msra.mxu0 0.0
    %1531 = vmatprep.subr.mxu0 0.0
    %1532 = vmatpush1.msra.mxu0 0.0
    %1533 = vmatprep.subr.mxu0 0.0
    %1534 = vmatpush1.msra.mxu0 0.0
    %1535 = vmatprep.subr.mxu0 0.0
    %1536 = vmatpush1.msra.mxu0 0.0
    %1537 = vmatprep.subr.mxu0 %v1509
    %1538 = vmatpush1.msra.mxu0 %v1508
    %1539 = vmatprep.subr.mxu0 %v1506
    %1540 = vmatpush1.msra.mxu0 %v1505
    %1541 = vmatprep.subr.mxu0 %v1503
    %1542 = vmatpush1.msra.mxu0 %v1502
    %1543 = vmatprep.subr.mxu0 %v1500
    %1544 = vmatpush1.msra.mxu0 %v1499
    %1545 = vmatprep.subr.mxu0 %v1497
    %1546 = vmatpush1.msra.mxu0 %v1496
    %1547 = vmatprep.subr.mxu0 %v1494
    %1548 = vmatpush1.msra.mxu0 %v1493
    %1549 = vmatprep.subr.mxu0 0.0
    %1550 = vmatpush2.msra.mxu0 0.0
    %1551 = vmatprep.subr.mxu0 0.0
    %1552 = vmatpush2.msra.mxu0 0.0
    %1553 = vmatprep.subr.mxu0 0.0
    %1554 = vmatpush2.msra.mxu0 0.0
    %1555 = vmatprep.subr.mxu0 0.0
    %1556 = vmatpush2.msra.mxu0 0.0
    %1557 = vmatprep.subr.mxu0 0.0
    %1558 = vmatpush2.msra.mxu0 0.0
    %1559 = vmatprep.subr.mxu0 0.0
    %1560 = vmatpush2.msra.mxu0 0.0
    %1561 = vmatprep.subr.mxu0 0.0
    %1562 = vmatpush2.msra.mxu0 0.0
    %1563 = vmatprep.subr.mxu0 0.0
    %1564 = vmatpush2.msra.mxu0 0.0
    %1565 = vmatprep.subr.mxu0 0.0
    %1566 = vmatpush2.msra.mxu0 0.0
    %1567 = vmatprep.subr.mxu0 0.0
    %1568 = vmatpush2.msra.mxu0 0.0
    %1569 = vmatprep.subr.mxu0 0.0
    %1570 = vmatpush2.msra.mxu0 0.0
    %1571 = vmatprep.subr.mxu0 0.0
    %1572 = vmatpush2.msra.mxu0 0.0
    %1573 = vmatprep.subr.mxu0 0.0
    %1574 = vmatpush2.msra.mxu0 0.0
    %1575 = vmatprep.subr.mxu0 0.0
    %1576 = vmatpush2.msra.mxu0 0.0
    %1577 = vmatprep.subr.mxu0 0.0
    %1578 = vmatpush2.msra.mxu0 0.0
    %1579 = vmatprep.subr.mxu0 0.0
    %1580 = vmatpush2.msra.mxu0 0.0
    %1581 = vmatprep.mubr.f32.mxu0 0.0
    %1582 = vmatmul.mubr.f32.gmra.mxu0 %v1512
    %v1583 = vpop.f32.mrf.mxu0
    %v1584 = vadd.f32 0.0, %v1583
    %v1585 = vpop.f32.mrf.mxu0
    %v1586 = vadd.f32 0.0, %v1585
    %1587 = vmatprep.mubr.f32.mxu0 0.0
    %1588 = vmatmul.mubr.f32.gmra.mxu0 %v1515
    %v1589 = vpop.f32.mrf.mxu0
    %v1590 = vadd.f32 0.0, %v1589
    %v1591 = vpop.f32.mrf.mxu0
    %v1592 = vadd.f32 0.0, %v1591
    %1593 = vdwg.mxu0
    %1594 = vmatprep.subr.mxu0 0.0
    %1595 = vmatpush1.msra.mxu0 0.0
    %1596 = vmatprep.subr.mxu0 0.0
    %1597 = vmatpush1.msra.mxu0 0.0
    %1598 = vmatprep.subr.mxu0 0.0
    %1599 = vmatpush1.msra.mxu0 0.0
    %1600 = vmatprep.subr.mxu0 0.0
    %1601 = vmatpush1.msra.mxu0 0.0
    %1602 = vmatprep.subr.mxu0 0.0
    %1603 = vmatpush1.msra.mxu0 0.0
    %1604 = vmatprep.subr.mxu0 0.0
    %1605 = vmatpush1.msra.mxu0 0.0
    %1606 = vmatprep.subr.mxu0 0.0
    %1607 = vmatpush1.msra.mxu0 0.0
    %1608 = vmatprep.subr.mxu0 0.0
    %1609 = vmatpush1.msra.mxu0 0.0
    %1610 = vmatprep.subr.mxu0 0.0
    %1611 = vmatpush1.msra.mxu0 0.0
    %1612 = vmatprep.subr.mxu0 0.0
    %1613 = vmatpush1.msra.mxu0 0.0
    %1614 = vmatprep.subr.mxu0 0.0
    %1615 = vmatpush1.msra.mxu0 %v1510
    %1616 = vmatprep.subr.mxu0 0.0
    %1617 = vmatpush1.msra.mxu0 %v1507
    %1618 = vmatprep.subr.mxu0 0.0
    %1619 = vmatpush1.msra.mxu0 %v1504
    %1620 = vmatprep.subr.mxu0 0.0
    %1621 = vmatpush1.msra.mxu0 %v1501
    %1622 = vmatprep.subr.mxu0 0.0
    %1623 = vmatpush1.msra.mxu0 %v1498
    %1624 = vmatprep.subr.mxu0 0.0
    %1625 = vmatpush1.msra.mxu0 %v1495
    %1626 = vmatprep.subr.mxu0 0.0
    %1627 = vmatpush2.msra.mxu0 0.0
    %1628 = vmatprep.subr.mxu0 0.0
    %1629 = vmatpush2.msra.mxu0 0.0
    %1630 = vmatprep.subr.mxu0 0.0
    %1631 = vmatpush2.msra.mxu0 0.0
    %1632 = vmatprep.subr.mxu0 0.0
    %1633 = vmatpush2.msra.mxu0 0.0
    %1634 = vmatprep.subr.mxu0 0.0
    %1635 = vmatpush2.msra.mxu0 0.0
    %1636 = vmatprep.subr.mxu0 0.0
    %1637 = vmatpush2.msra.mxu0 0.0
    %1638 = vmatprep.subr.mxu0 0.0
    %1639 = vmatpush2.msra.mxu0 0.0
    %1640 = vmatprep.subr.mxu0 0.0
    %1641 = vmatpush2.msra.mxu0 0.0
    %1642 = vmatprep.subr.mxu0 0.0
    %1643 = vmatpush2.msra.mxu0 0.0
    %1644 = vmatprep.subr.mxu0 0.0
    %1645 = vmatpush2.msra.mxu0 0.0
    %1646 = vmatprep.subr.mxu0 0.0
    %1647 = vmatpush2.msra.mxu0 0.0
    %1648 = vmatprep.subr.mxu0 0.0
    %1649 = vmatpush2.msra.mxu0 0.0
    %1650 = vmatprep.subr.mxu0 0.0
    %1651 = vmatpush2.msra.mxu0 0.0
    %1652 = vmatprep.subr.mxu0 0.0
    %1653 = vmatpush2.msra.mxu0 0.0
    %1654 = vmatprep.subr.mxu0 0.0
    %1655 = vmatpush2.msra.mxu0 0.0
    %1656 = vmatprep.subr.mxu0 0.0
    %1657 = vmatpush2.msra.mxu0 0.0
    %1658 = vmatprep.mubr.f32.mxu0 0.0
    %1659 = vmatmul.mubr.f32.gmra.mxu0 %v1512
    %v1660 = vpop.f32.mrf.mxu0
    %v1661 = vadd.f32 0.0, %v1660
    %v1662 = vpop.f32.mrf.mxu0
    %1663 = vmatprep.mubr.f32.mxu0 0.0
    %1664 = vmatmul.mubr.f32.gmra.mxu0 %v1515
    %v1665 = vpop.f32.mrf.mxu0
    %v1666 = vadd.f32 0.0, %v1665
    %v1667 = vpop.f32.mrf.mxu0
    %1668 = vdwg.mxu0
    %v1669 = vld [vmem:[#allocation2 + $0x450] sm:$0xf]
    %v1670 = vld [vmem:[#allocation2 + $0x468] sm:$0xf]
    %vm1671 = vcmask 97280
    %v1673 = vsel %vm1671, %v1670, 0
    %v1676 = vsel %vm1048, %v1592, 0
    %1678 = vmatprep.subr.mxu0 0.0
    %1679 = vmatpush1.msra.mxu0 0.0
    %1680 = vmatprep.subr.mxu0 0.0
    %1681 = vmatpush1.msra.mxu0 0.0
    %1682 = vmatprep.subr.mxu0 0.0
    %1683 = vmatpush1.msra.mxu0 0.0
    %1684 = vmatprep.subr.mxu0 0.0
    %1685 = vmatpush1.msra.mxu0 0.0
    %1686 = vmatprep.subr.mxu0 0.0
    %1687 = vmatpush1.msra.mxu0 0.0
    %1688 = vmatprep.subr.mxu0 0.0
    %1689 = vmatpush1.msra.mxu0 0.0
    %1690 = vmatprep.subr.mxu0 0.0
    %1691 = vmatpush1.msra.mxu0 0.0
    %1692 = vmatprep.subr.mxu0 0.0
    %1693 = vmatpush1.msra.mxu0 0.0
    %1694 = vmatprep.subr.mxu0 0.0
    %1695 = vmatpush1.msra.mxu0 0.0
    %1696 = vmatprep.subr.mxu0 0.0
    %1697 = vmatpush1.msra.mxu0 0.0
    %1698 = vmatprep.subr.mxu0 0.0
    %1699 = vmatpush1.msra.mxu0 0.0
    %1700 = vmatprep.subr.mxu0 0.0
    %1701 = vmatpush1.msra.mxu0 0.0
    %1702 = vmatprep.subr.mxu0 0.0
    %1703 = vmatpush1.msra.mxu0 0.0
    %1704 = vmatprep.subr.mxu0 0.0
    %1705 = vmatpush1.msra.mxu0 0.0
    %1706 = vmatprep.subr.mxu0 0.0
    %1707 = vmatpush1.msra.mxu0 %v1676
    %1708 = vmatprep.subr.mxu0 0.0
    %1709 = vmatpush1.msra.mxu0 %v1586
    %1710 = vmatprep.subr.mxu0 0.0
    %1711 = vmatpush2.msra.mxu0 0.0
    %1712 = vmatprep.subr.mxu0 0.0
    %1713 = vmatpush2.msra.mxu0 0.0
    %1714 = vmatprep.subr.mxu0 0.0
    %1715 = vmatpush2.msra.mxu0 0.0
    %1716 = vmatprep.subr.mxu0 0.0
    %1717 = vmatpush2.msra.mxu0 0.0
    %1718 = vmatprep.subr.mxu0 0.0
    %1719 = vmatpush2.msra.mxu0 0.0
    %1720 = vmatprep.subr.mxu0 0.0
    %1721 = vmatpush2.msra.mxu0 0.0
    %1722 = vmatprep.subr.mxu0 0.0
    %1723 = vmatpush2.msra.mxu0 0.0
    %1724 = vmatprep.subr.mxu0 0.0
    %1725 = vmatpush2.msra.mxu0 0.0
    %1726 = vmatprep.subr.mxu0 0.0
    %1727 = vmatpush2.msra.mxu0 0.0
    %1728 = vmatprep.subr.mxu0 0.0
    %1729 = vmatpush2.msra.mxu0 0.0
    %1730 = vmatprep.subr.mxu0 0.0
    %1731 = vmatpush2.msra.mxu0 0.0
    %1732 = vmatprep.subr.mxu0 0.0
    %1733 = vmatpush2.msra.mxu0 0.0
    %1734 = vmatprep.subr.mxu0 0.0
    %1735 = vmatpush2.msra.mxu0 0.0
    %1736 = vmatprep.subr.mxu0 0.0
    %1737 = vmatpush2.msra.mxu0 0.0
    %1738 = vmatprep.subr.mxu0 0.0
    %1739 = vmatpush2.msra.mxu0 0.0
    %1740 = vmatprep.subr.mxu0 0.0
    %1741 = vmatpush2.msra.mxu0 0.0
    %1742 = vmatprep.mubr.f32.mxu0 0.0
    %1743 = vmatmul.mubr.f32.gmra.mxu0 %v1673
    %v1744 = vpop.f32.mrf.mxu0
    %v1745 = vadd.f32 0.0, %v1744
    %v1746 = vpop.f32.mrf.mxu0
    %1747 = vdwg.mxu0
    %v1749 = vsel %vm1671, %v1669, 0
    %v1752 = vsel %vm1048, %v1590, 0
    %1754 = vmatprep.subr.mxu0 0.0
    %1755 = vmatpush1.msra.mxu0 0.0
    %1756 = vmatprep.subr.mxu0 0.0
    %1757 = vmatpush1.msra.mxu0 0.0
    %1758 = vmatprep.subr.mxu0 0.0
    %1759 = vmatpush1.msra.mxu0 0.0
    %1760 = vmatprep.subr.mxu0 0.0
    %1761 = vmatpush1.msra.mxu0 0.0
    %1762 = vmatprep.subr.mxu0 0.0
    %1763 = vmatpush1.msra.mxu0 0.0
    %1764 = vmatprep.subr.mxu0 0.0
    %1765 = vmatpush1.msra.mxu0 0.0
    %1766 = vmatprep.subr.mxu0 0.0
    %1767 = vmatpush1.msra.mxu0 0.0
    %1768 = vmatprep.subr.mxu0 0.0
    %1769 = vmatpush1.msra.mxu0 0.0
    %1770 = vmatprep.subr.mxu0 0.0
    %1771 = vmatpush1.msra.mxu0 0.0
    %1772 = vmatprep.subr.mxu0 0.0
    %1773 = vmatpush1.msra.mxu0 0.0
    %1774 = vmatprep.subr.mxu0 0.0
    %1775 = vmatpush1.msra.mxu0 0.0
    %1776 = vmatprep.subr.mxu0 0.0
    %1777 = vmatpush1.msra.mxu0 0.0
    %1778 = vmatprep.subr.mxu0 0.0
    %1779 = vmatpush1.msra.mxu0 0.0
    %1780 = vmatprep.subr.mxu0 0.0
    %1781 = vmatpush1.msra.mxu0 0.0
    %1782 = vmatprep.subr.mxu0 0.0
    %1783 = vmatpush1.msra.mxu0 %v1752
    %1784 = vmatprep.subr.mxu0 0.0
    %1785 = vmatpush1.msra.mxu0 %v1584
    %1786 = vmatprep.subr.mxu0 0.0
    %1787 = vmatpush2.msra.mxu0 0.0
    %1788 = vmatprep.subr.mxu0 0.0
    %1789 = vmatpush2.msra.mxu0 0.0
    %1790 = vmatprep.subr.mxu0 0.0
    %1791 = vmatpush2.msra.mxu0 0.0
    %1792 = vmatprep.subr.mxu0 0.0
    %1793 = vmatpush2.msra.mxu0 0.0
    %1794 = vmatprep.subr.mxu0 0.0
    %1795 = vmatpush2.msra.mxu0 0.0
    %1796 = vmatprep.subr.mxu0 0.0
    %1797 = vmatpush2.msra.mxu0 0.0
    %1798 = vmatprep.subr.mxu0 0.0
    %1799 = vmatpush2.msra.mxu0 0.0
    %1800 = vmatprep.subr.mxu0 0.0
    %1801 = vmatpush2.msra.mxu0 0.0
    %1802 = vmatprep.subr.mxu0 0.0
    %1803 = vmatpush2.msra.mxu0 0.0
    %1804 = vmatprep.subr.mxu0 0.0
    %1805 = vmatpush2.msra.mxu0 0.0
    %1806 = vmatprep.subr.mxu0 0.0
    %1807 = vmatpush2.msra.mxu0 0.0
    %1808 = vmatprep.subr.mxu0 0.0
    %1809 = vmatpush2.msra.mxu0 0.0
    %1810 = vmatprep.subr.mxu0 0.0
    %1811 = vmatpush2.msra.mxu0 0.0
    %1812 = vmatprep.subr.mxu0 0.0
    %1813 = vmatpush2.msra.mxu0 0.0
    %1814 = vmatprep.subr.mxu0 0.0
    %1815 = vmatpush2.msra.mxu0 0.0
    %1816 = vmatprep.subr.mxu0 0.0
    %1817 = vmatpush2.msra.mxu0 0.0
    %1818 = vmatprep.mubr.f32.mxu0 0.0
    %1819 = vmatmul.mubr.f32.gmra.mxu0 %v1749
    %v1820 = vpop.f32.mrf.mxu0
    %v1821 = vadd.f32 %v1745, %v1820
    %v1822 = vpop.f32.mrf.mxu0
    %1823 = vdwg.mxu0
    %v1824 = vld [vmem:[#allocation2 + $0x480] sm:$0xf]
    %v1826 = vsel %vm1671, %v1824, 0
    %v1829 = vsel %vm1048, %v1666, 0
    %1831 = vmatprep.subr.mxu0 0.0
    %1832 = vmatpush1.msra.mxu0 0.0
    %1833 = vmatprep.subr.mxu0 0.0
    %1834 = vmatpush1.msra.mxu0 0.0
    %1835 = vmatprep.subr.mxu0 0.0
    %1836 = vmatpush1.msra.mxu0 0.0
    %1837 = vmatprep.subr.mxu0 0.0
    %1838 = vmatpush1.msra.mxu0 0.0
    %1839 = vmatprep.subr.mxu0 0.0
    %1840 = vmatpush1.msra.mxu0 0.0
    %1841 = vmatprep.subr.mxu0 0.0
    %1842 = vmatpush1.msra.mxu0 0.0
    %1843 = vmatprep.subr.mxu0 0.0
    %1844 = vmatpush1.msra.mxu0 0.0
    %1845 = vmatprep.subr.mxu0 0.0
    %1846 = vmatpush1.msra.mxu0 0.0
    %1847 = vmatprep.subr.mxu0 0.0
    %1848 = vmatpush1.msra.mxu0 0.0
    %1849 = vmatprep.subr.mxu0 0.0
    %1850 = vmatpush1.msra.mxu0 0.0
    %1851 = vmatprep.subr.mxu0 0.0
    %1852 = vmatpush1.msra.mxu0 0.0
    %1853 = vmatprep.subr.mxu0 0.0
    %1854 = vmatpush1.msra.mxu0 0.0
    %1855 = vmatprep.subr.mxu0 0.0
    %1856 = vmatpush1.msra.mxu0 0.0
    %1857 = vmatprep.subr.mxu0 0.0
    %1858 = vmatpush1.msra.mxu0 0.0
    %1859 = vmatprep.subr.mxu0 0.0
    %1860 = vmatpush1.msra.mxu0 %v1829
    %1861 = vmatprep.subr.mxu0 0.0
    %1862 = vmatpush1.msra.mxu0 %v1661
    %1863 = vmatprep.subr.mxu0 0.0
    %1864 = vmatpush2.msra.mxu0 0.0
    %1865 = vmatprep.subr.mxu0 0.0
    %1866 = vmatpush2.msra.mxu0 0.0
    %1867 = vmatprep.subr.mxu0 0.0
    %1868 = vmatpush2.msra.mxu0 0.0
    %1869 = vmatprep.subr.mxu0 0.0
    %1870 = vmatpush2.msra.mxu0 0.0
    %1871 = vmatprep.subr.mxu0 0.0
    %1872 = vmatpush2.msra.mxu0 0.0
    %1873 = vmatprep.subr.mxu0 0.0
    %1874 = vmatpush2.msra.mxu0 0.0
    %1875 = vmatprep.subr.mxu0 0.0
    %1876 = vmatpush2.msra.mxu0 0.0
    %1877 = vmatprep.subr.mxu0 0.0
    %1878 = vmatpush2.msra.mxu0 0.0
    %1879 = vmatprep.subr.mxu0 0.0
    %1880 = vmatpush2.msra.mxu0 0.0
    %1881 = vmatprep.subr.mxu0 0.0
    %1882 = vmatpush2.msra.mxu0 0.0
    %1883 = vmatprep.subr.mxu0 0.0
    %1884 = vmatpush2.msra.mxu0 0.0
    %1885 = vmatprep.subr.mxu0 0.0
    %1886 = vmatpush2.msra.mxu0 0.0
    %1887 = vmatprep.subr.mxu0 0.0
    %1888 = vmatpush2.msra.mxu0 0.0
    %1889 = vmatprep.subr.mxu0 0.0
    %1890 = vmatpush2.msra.mxu0 0.0
    %1891 = vmatprep.subr.mxu0 0.0
    %1892 = vmatpush2.msra.mxu0 0.0
    %1893 = vmatprep.subr.mxu0 0.0
    %1894 = vmatpush2.msra.mxu0 0.0
    %1895 = vmatprep.mubr.f32.mxu0 0.0
    %1896 = vmatmul.mubr.f32.gmra.mxu0 %v1826
    %v1897 = vpop.f32.mrf.mxu0
    %v1898 = vadd.f32 0.0, %v1897
    %v1899 = vpop.f32.mrf.mxu0
    %1900 = vdwg.mxu0
    %v1901 = vadd.f32 %v1821, %v1898
    %v1902 = vld [vmem:[#allocation2 + $0x528] sm:$0xff]
    %v1903 = vld [vmem:[#allocation2 + $0x540] sm:$0xff]
    %v1904 = vld [vmem:[#allocation2 + $0x558] sm:$0xff]
    %v1905 = vld [vmem:[#allocation2 + $0x570] sm:$0xff]
    %vm1906 = vcmask 257024
    %v1907 = vsel %vm1906, %v1901, 0.0
    %v1908 = vrot.slane %v1907, 4
    %v1909 = vadd.f32 %v1907, %v1908
    %v1910 = vrot.slane %v1909, 2
    %v1911 = vadd.f32 %v1909, %v1910
    %v1912 = vrot.slane %v1911, 1
    %v1913 = vadd.f32 %v1911, %v1912
    %vm1914 = vcmask 261120
    %v1916 = vsel %vm1914, %v1913, 0
    %1918 = vmatprep.subr.mxu0 0.0
    %1919 = vmatpush1.msra.mxu0 0.0
    %1920 = vmatprep.subr.mxu0 0.0
    %1921 = vmatpush1.msra.mxu0 0.0
    %1922 = vmatprep.subr.mxu0 0.0
    %1923 = vmatpush1.msra.mxu0 0.0
    %1924 = vmatprep.subr.mxu0 0.0
    %1925 = vmatpush1.msra.mxu0 0.0
    %1926 = vmatprep.subr.mxu0 0.0
    %1927 = vmatpush1.msra.mxu0 0.0
    %1928 = vmatprep.subr.mxu0 0.0
    %1929 = vmatpush1.msra.mxu0 0.0
    %1930 = vmatprep.subr.mxu0 0.0
    %1931 = vmatpush1.msra.mxu0 0.0
    %1932 = vmatprep.subr.mxu0 0.0
    %1933 = vmatpush1.msra.mxu0 0.0
    %1934 = vmatprep.subr.mxu0 0.0
    %1935 = vmatpush1.msra.mxu0 0.0
    %1936 = vmatprep.subr.mxu0 0.0
    %1937 = vmatpush1.msra.mxu0 0.0
    %1938 = vmatprep.subr.mxu0 0.0
    %1939 = vmatpush1.msra.mxu0 0.0
    %1940 = vmatprep.subr.mxu0 0.0
    %1941 = vmatpush1.msra.mxu0 0.0
    %1942 = vmatprep.subr.mxu0 0.0
    %1943 = vmatpush1.msra.mxu0 %v1905
    %1944 = vmatprep.subr.mxu0 0.0
    %1945 = vmatpush1.msra.mxu0 %v1904
    %1946 = vmatprep.subr.mxu0 0.0
    %1947 = vmatpush1.msra.mxu0 %v1903
    %1948 = vmatprep.subr.mxu0 0.0
    %1949 = vmatpush1.msra.mxu0 %v1902
    %1950 = vmatprep.subr.mxu0 0.0
    %1951 = vmatpush2.msra.mxu0 0.0
    %1952 = vmatprep.subr.mxu0 0.0
    %1953 = vmatpush2.msra.mxu0 0.0
    %1954 = vmatprep.subr.mxu0 0.0
    %1955 = vmatpush2.msra.mxu0 0.0
    %1956 = vmatprep.subr.mxu0 0.0
    %1957 = vmatpush2.msra.mxu0 0.0
    %1958 = vmatprep.subr.mxu0 0.0
    %1959 = vmatpush2.msra.mxu0 0.0
    %1960 = vmatprep.subr.mxu0 0.0
    %1961 = vmatpush2.msra.mxu0 0.0
    %1962 = vmatprep.subr.mxu0 0.0
    %1963 = vmatpush2.msra.mxu0 0.0
    %1964 = vmatprep.subr.mxu0 0.0
    %1965 = vmatpush2.msra.mxu0 0.0
    %1966 = vmatprep.subr.mxu0 0.0
    %1967 = vmatpush2.msra.mxu0 0.0
    %1968 = vmatprep.subr.mxu0 0.0
    %1969 = vmatpush2.msra.mxu0 0.0
    %1970 = vmatprep.subr.mxu0 0.0
    %1971 = vmatpush2.msra.mxu0 0.0
    %1972 = vmatprep.subr.mxu0 0.0
    %1973 = vmatpush2.msra.mxu0 0.0
    %1974 = vmatprep.subr.mxu0 0.0
    %1975 = vmatpush2.msra.mxu0 0.0
    %1976 = vmatprep.subr.mxu0 0.0
    %1977 = vmatpush2.msra.mxu0 0.0
    %1978 = vmatprep.subr.mxu0 0.0
    %1979 = vmatpush2.msra.mxu0 0.0
    %1980 = vmatprep.subr.mxu0 0.0
    %1981 = vmatpush2.msra.mxu0 0.0
    %1982 = vmatprep.mubr.f32.mxu0 0.0
    %1983 = vmatmul.mubr.f32.gmra.mxu0 %v1916
    %v1984 = vpop.f32.mrf.mxu0
    %v1985 = vadd.f32 0.0, %v1984
    %v1986 = vpop.f32.mrf.mxu0
    %1987 = vdwg.mxu0
    %v1988 = vlaneseq
    %v1989 = vshrl.u32 %v1988, 7
    %v1990 = vsub.s32 0, %v1989
    %v1991 = vrot.slane %v1985, %v1990
    %v1992 = vsub.f32 %v1901, %v1991
    %v1993 = vmul.f32 %v1992, %v1992
    %v1994 = vsel %vm1906, %v1993, 0.0
    %v1995 = vrot.slane %v1994, 4
    %v1996 = vadd.f32 %v1994, %v1995
    %v1997 = vrot.slane %v1996, 2
    %v1998 = vadd.f32 %v1996, %v1997
    %v1999 = vrot.slane %v1998, 1
    %v2000 = vadd.f32 %v1998, %v1999
    %v2001 = vld [vmem:[#allocation2 + $0x588] ss:$0 sm:$0xff]
    %v2003 = vsel %vm1914, %v2000, 0
    %2005 = vmatprep.subr.mxu0 0.0
    %2006 = vmatpush1.msra.mxu0 0.0
    %2007 = vmatprep.subr.mxu0 0.0
    %2008 = vmatpush1.msra.mxu0 0.0
    %2009 = vmatprep.subr.mxu0 0.0
    %2010 = vmatpush1.msra.mxu0 0.0
    %2011 = vmatprep.subr.mxu0 0.0
    %2012 = vmatpush1.msra.mxu0 0.0
    %2013 = vmatprep.subr.mxu0 0.0
    %2014 = vmatpush1.msra.mxu0 0.0
    %2015 = vmatprep.subr.mxu0 0.0
    %2016 = vmatpush1.msra.mxu0 0.0
    %2017 = vmatprep.subr.mxu0 0.0
    %2018 = vmatpush1.msra.mxu0 0.0
    %2019 = vmatprep.subr.mxu0 0.0
    %2020 = vmatpush1.msra.mxu0 0.0
    %2021 = vmatprep.subr.mxu0 0.0
    %2022 = vmatpush1.msra.mxu0 0.0
    %2023 = vmatprep.subr.mxu0 0.0
    %2024 = vmatpush1.msra.mxu0 0.0
    %2025 = vmatprep.subr.mxu0 0.0
    %2026 = vmatpush1.msra.mxu0 0.0
    %2027 = vmatprep.subr.mxu0 0.0
    %2028 = vmatpush1.msra.mxu0 0.0
    %2029 = vmatprep.subr.mxu0 0.0
    %2030 = vmatpush1.msra.mxu0 %v1905
    %2031 = vmatprep.subr.mxu0 0.0
    %2032 = vmatpush1.msra.mxu0 %v1904
    %2033 = vmatprep.subr.mxu0 0.0
    %2034 = vmatpush1.msra.mxu0 %v1903
    %2035 = vmatprep.subr.mxu0 0.0
    %2036 = vmatpush1.msra.mxu0 %v1902
    %2037 = vmatprep.subr.mxu0 0.0
    %2038 = vmatpush2.msra.mxu0 0.0
    %2039 = vmatprep.subr.mxu0 0.0
    %2040 = vmatpush2.msra.mxu0 0.0
    %2041 = vmatprep.subr.mxu0 0.0
    %2042 = vmatpush2.msra.mxu0 0.0
    %2043 = vmatprep.subr.mxu0 0.0
    %2044 = vmatpush2.msra.mxu0 0.0
    %2045 = vmatprep.subr.mxu0 0.0
    %2046 = vmatpush2.msra.mxu0 0.0
    %2047 = vmatprep.subr.mxu0 0.0
    %2048 = vmatpush2.msra.mxu0 0.0
    %2049 = vmatprep.subr.mxu0 0.0
    %2050 = vmatpush2.msra.mxu0 0.0
    %2051 = vmatprep.subr.mxu0 0.0
    %2052 = vmatpush2.msra.mxu0 0.0
    %2053 = vmatprep.subr.mxu0 0.0
    %2054 = vmatpush2.msra.mxu0 0.0
    %2055 = vmatprep.subr.mxu0 0.0
    %2056 = vmatpush2.msra.mxu0 0.0
    %2057 = vmatprep.subr.mxu0 0.0
    %2058 = vmatpush2.msra.mxu0 0.0
    %2059 = vmatprep.subr.mxu0 0.0
    %2060 = vmatpush2.msra.mxu0 0.0
    %2061 = vmatprep.subr.mxu0 0.0
    %2062 = vmatpush2.msra.mxu0 0.0
    %2063 = vmatprep.subr.mxu0 0.0
    %2064 = vmatpush2.msra.mxu0 0.0
    %2065 = vmatprep.subr.mxu0 0.0
    %2066 = vmatpush2.msra.mxu0 0.0
    %2067 = vmatprep.subr.mxu0 0.0
    %2068 = vmatpush2.msra.mxu0 0.0
    %2069 = vmatprep.mubr.f32.mxu0 0.0
    %2070 = vmatmul.mubr.f32.gmra.mxu0 %v2003
    %v2071 = vpop.f32.mrf.mxu0
    %v2072 = vadd.f32 1e-05, %v2071
    %v2073 = vpop.f32.mrf.mxu0
    %2074 = vdwg.mxu0
    %v2075 = vrsqrt.pop %v2072
    %v2076 = vmul.f32 %v2001, %v2075
    %v2077 = vlaneseq
    %v2078 = vshrl.u32 %v2077, 7
    %v2079 = vsub.s32 0, %v2078
    %v2080 = vrot.slane %v2076, %v2079
    %v2081 = vmul.f32 %v2080, %v1992
    %v2082 = vld [vmem:[#allocation2 + $0x5a0] ss:$0 sm:$0xff]
    %v2083 = vadd.f32 %v2081, %v2082
    %v2084 = vmax.f32 %v2083, 0.0
    %2086 = vrot.lane.b32.xlu0 %v2084, 112
    %v2087 = vpop.permute.xlu0 %2086
    %v2089 = vmax.f32 %v2084, %v2087
    %v2090 = vlaneseq
    %v2091 = vshrl.u32 %v2090, 7
    %vm2092 = vcmask 123904
    %v2093 = vsel %vm2092, %v2089, -inf
    %v2094 = vrot.slane %v2093, 4
    %v2095 = vmax.f32 %v2093, %v2094
    %v2096 = vrot.slane %v2095, 2
    %v2097 = vmax.f32 %v2095, %v2096
    %v2098 = vrot.slane %v2097, 1
    %v2099 = vmax.f32 %v2097, %v2098
    %vm2100 = vcmp.eq.s32.totalorder %v2091, 0
    %v2101 = vsel %vm2100, %v2099, 0.0
    %vm2102 = vcmask 125954
    %v2103 = vsel %vm2102, %v2089, -inf
    %v2104 = vrot.slane %v2103, 4
    %v2105 = vmax.f32 %v2103, %v2104
    %v2106 = vrot.slane %v2105, 2
    %v2107 = vmax.f32 %v2105, %v2106
    %v2108 = vrot.slane %v2107, 1
    %v2109 = vmax.f32 %v2107, %v2108
    %vm2110 = vcmp.eq.s32.totalorder %v2091, 1
    %v2111 = vsel %vm2110, %v2109, %v2101
    %v2112 = vld [vmem:[#allocation2 + $0x5b8] sm:$0xff]
    %v2113 = vld [vmem:[#allocation2 + $0x5d0] sm:$0xff]
    %v2114 = vld [vmem:[#allocation2 + $0x5e8] ss:$0 sm:$0xff]
    %vm2115 = vcmask 130048
    %v2117 = vsel %vm2115, %v2111, 0
    %2119 = vmatprep.subr.mxu0 0.0
    %2120 = vmatpush1.msra.mxu0 0.0
    %2121 = vmatprep.subr.mxu0 0.0
    %2122 = vmatpush1.msra.mxu0 0.0
    %2123 = vmatprep.subr.mxu0 0.0
    %2124 = vmatpush1.msra.mxu0 0.0
    %2125 = vmatprep.subr.mxu0 0.0
    %2126 = vmatpush1.msra.mxu0 0.0
    %2127 = vmatprep.subr.mxu0 0.0
    %2128 = vmatpush1.msra.mxu0 0.0
    %2129 = vmatprep.subr.mxu0 0.0
    %2130 = vmatpush1.msra.mxu0 0.0
    %2131 = vmatprep.subr.mxu0 0.0
    %2132 = vmatpush1.msra.mxu0 0.0
    %2133 = vmatprep.subr.mxu0 0.0
    %2134 = vmatpush1.msra.mxu0 0.0
    %2135 = vmatprep.subr.mxu0 0.0
    %2136 = vmatpush1.msra.mxu0 0.0
    %2137 = vmatprep.subr.mxu0 0.0
    %2138 = vmatpush1.msra.mxu0 0.0
    %2139 = vmatprep.subr.mxu0 0.0
    %2140 = vmatpush1.msra.mxu0 0.0
    %2141 = vmatprep.subr.mxu0 0.0
    %2142 = vmatpush1.msra.mxu0 0.0
    %2143 = vmatprep.subr.mxu0 0.0
    %2144 = vmatpush1.msra.mxu0 0.0
    %2145 = vmatprep.subr.mxu0 0.0
    %2146 = vmatpush1.msra.mxu0 0.0
    %2147 = vmatprep.subr.mxu0 0.0
    %2148 = vmatpush1.msra.mxu0 %v2113
    %2149 = vmatprep.subr.mxu0 0.0
    %2150 = vmatpush1.msra.mxu0 %v2112
    %2151 = vmatprep.subr.mxu0 0.0
    %2152 = vmatpush2.msra.mxu0 0.0
    %2153 = vmatprep.subr.mxu0 0.0
    %2154 = vmatpush2.msra.mxu0 0.0
    %2155 = vmatprep.subr.mxu0 0.0
    %2156 = vmatpush2.msra.mxu0 0.0
    %2157 = vmatprep.subr.mxu0 0.0
    %2158 = vmatpush2.msra.mxu0 0.0
    %2159 = vmatprep.subr.mxu0 0.0
    %2160 = vmatpush2.msra.mxu0 0.0
    %2161 = vmatprep.subr.mxu0 0.0
    %2162 = vmatpush2.msra.mxu0 0.0
    %2163 = vmatprep.subr.mxu0 0.0
    %2164 = vmatpush2.msra.mxu0 0.0
    %2165 = vmatprep.subr.mxu0 0.0
    %2166 = vmatpush2.msra.mxu0 0.0
    %2167 = vmatprep.subr.mxu0 0.0
    %2168 = vmatpush2.msra.mxu0 0.0
    %2169 = vmatprep.subr.mxu0 0.0
    %2170 = vmatpush2.msra.mxu0 0.0
    %2171 = vmatprep.subr.mxu0 0.0
    %2172 = vmatpush2.msra.mxu0 0.0
    %2173 = vmatprep.subr.mxu0 0.0
    %2174 = vmatpush2.msra.mxu0 0.0
    %2175 = vmatprep.subr.mxu0 0.0
    %2176 = vmatpush2.msra.mxu0 0.0
    %2177 = vmatprep.subr.mxu0 0.0
    %2178 = vmatpush2.msra.mxu0 0.0
    %2179 = vmatprep.subr.mxu0 0.0
    %2180 = vmatpush2.msra.mxu0 0.0
    %2181 = vmatprep.subr.mxu0 0.0
    %2182 = vmatpush2.msra.mxu0 0.0
    %2183 = vmatprep.mubr.f32.mxu0 0.0
    %2184 = vmatmul.mubr.f32.gmra.mxu0 %v2117
    %v2185 = vpop.f32.mrf.mxu0
    %v2186 = vadd.f32 %v2114, %v2185
    %v2187 = vpop.f32.mrf.mxu0
    %2188 = vdwg.mxu0
    %vm2189 = vcmask 254976
    %2190 = vst.msk [vmem:[#allocation5] sm:$0x3] %vm2189, %v2186
    // Predicated region
    $region14: #{forward.1} parent=1 // pred_check
      _
    $region15: #{forward.1} parent=1 // pred_check_branch
      %2192 = sbr.rel (0) target = $region17
    $region16: #{forward.1} parent=1 // pred_region
      %s2194 = ssub.s32 32, 32
      %2195 = vsyncadd [#allocation4], %s2194
      %s2197 = sshll.u32 [#allocation5], 4
      %s2198 = int_to_ptr.vmem [resolvable:$true] %s2197
      %2200 = dma.vmem_to_hbm [thread:$0]  %s2198, 32, %s2, [#allocation4]
    $region17: #{forward.1} parent=1 // pred_fallthru
      _
    // Predicated region
    $region18: #{forward.1} parent=1 // pred_check
      _
    $region19: #{forward.1} parent=1 // pred_check_branch
      %2202 = sbr.rel (0) target = $region21
    $region20: #{forward.1} parent=1 // pred_region
      %2203 = dma.done [#allocation4], 32
    $region21: #{forward.1} parent=1 // pred_fallthru
      _
    %2204 = vsyncpa [#allocation3], 1
    %2205 = vsyncpa [#allocation4], 1

</llo_original>
